<compile_context>
chip_gen: v5e
topology: v5e:2x2
jax: 0.10.0
libtpu: 0.0.40
codegen_flags: <defaults>
</compile_context>

<pallas_src>
import jax
import jax.numpy as jnp
from jax.experimental import pallas as pl
from jax.experimental.pallas import tpu as pltpu

LAYER_NORM_EPS = 1e-7  # DeBERTa-v2 default layer_norm_eps


def _round_up(x, m):
    return ((x + m - 1) // m) * m


def _gelu_erf(x):
    # matches torch.nn.functional.gelu / HF "gelu" (erf formulation)
    return x * 0.5 * (1.0 + jax.lax.erf(x / jnp.sqrt(2.0).astype(x.dtype)))


def mlm_head_kernel(x_ref, w1_ref, b1_ref, gamma_ref, beta_ref,
                    w2_ref, dbias_ref, out_ref, h_scratch):
    """grid = (token tiles, vocab tiles); vocab is the inner, sequential axis.

    The transform is computed once per token tile (on vocab tile 0) and cached
    in bf16 VMEM scratch; every vocab tile reuses it for the decoder matmul.
    """
    j = pl.program_id(1)  # vocab tile index (inner, "arbitrary" -> sequential)

    @pl.when(j == 0)
    def _():
        # dense: (Tt, H) @ (H, H) + (1, H)   -- bf16 operands, f32 accumulation
        h = jnp.dot(x_ref[...], w1_ref[...],
                    preferred_element_type=jnp.float32) + b1_ref[...]
        # activation (erf GELU), in f32
        h = _gelu_erf(h)
        # LayerNorm over hidden dim (biased variance, like torch.nn.LayerNorm)
        mean = jnp.mean(h, axis=-1, keepdims=True)
        centered = h - mean
        var = jnp.mean(centered * centered, axis=-1, keepdims=True)
        h = centered * jax.lax.rsqrt(var + LAYER_NORM_EPS)
        h = h * gamma_ref[...] + beta_ref[...]
        h_scratch[...] = h.astype(h_scratch.dtype)  # bf16 MXU operand cache

    # decoder: (Tt, H) @ (H, Vt) + (1, Vt)   -- bf16 operands, f32 accumulation
    out_ref[...] = (jnp.dot(h_scratch[...], w2_ref[...],
                            preferred_element_type=jnp.float32)
                    + dbias_ref[...]).astype(out_ref.dtype)


def deberta_mlm_head(x, w1, b1, gamma, beta, w2, dbias, *,
                     t_tile=256, vocab_tile=512, out_dtype=jnp.float32):
    """x: (B, S, H) -> prediction_scores: (B, S, V)."""
    B, S, H = x.shape
    V = w2.shape[1]
    T = B * S

    assert t_tile % 8 == 0, "t_tile must be a multiple of 8 (sublanes)"
    assert vocab_tile % 128 == 0, "vocab_tile must be a multiple of 128 (lanes)"

    # Clamp tiles for small problems, then pad T / V up to tile multiples.
    t_tile = min(t_tile, _round_up(T, 8))
    vocab_tile = min(vocab_tile, _round_up(V, 128))
    Tp = _round_up(T, t_tile)
    Vp = _round_up(V, vocab_tile)

    # bf16 MXU operands at the boundary (accumulation stays f32 in-kernel).
    x2d = x.reshape(T, H).astype(jnp.bfloat16)
    if Tp != T:
        x2d = jnp.pad(x2d, ((0, Tp - T), (0, 0)))
    w1_bf = w1.astype(jnp.bfloat16)
    w2_bf = w2.astype(jnp.bfloat16)
    dbias_2d = dbias.astype(jnp.float32).reshape(1, V)
    if Vp != V:
        w2_bf = jnp.pad(w2_bf, ((0, 0), (0, Vp - V)))
        dbias_2d = jnp.pad(dbias_2d, ((0, 0), (0, Vp - V)))
    b1_2d = b1.astype(jnp.float32).reshape(1, H)
    gamma_2d = gamma.astype(jnp.float32).reshape(1, H)
    beta_2d = beta.astype(jnp.float32).reshape(1, H)

    grid = (Tp // t_tile, Vp // vocab_tile)

    # VMEM budget (double-buffered inputs/outputs + scratch), capped for v7x.
    out_bytes = jnp.dtype(out_dtype).itemsize
    vmem_needed = (
        2 * t_tile * H * 2                      # x tile (bf16)
        + 2 * H * H * 2                         # W1 (bf16)
        + 2 * 3 * H * 4                         # b1 / gamma / beta (f32)
        + 2 * H * vocab_tile * 2                # W2 tile (bf16)
        + 2 * vocab_tile * 4                    # decoder-bias tile (f32)
        + 2 * t_tile * vocab_tile * out_bytes   # output tile
        + t_tile * H * 2                        # h_scratch (bf16)
    )
    vmem_limit = min(int(vmem_needed * 1.5) + (4 << 20), 64 << 20)

    out = pl.pallas_call(
        mlm_head_kernel,
        out_shape=jax.ShapeDtypeStruct((Tp, Vp), out_dtype),
        grid_spec=pltpu.PrefetchScalarGridSpec(
            num_scalar_prefetch=0,
            grid=grid,
            in_specs=[
                pl.BlockSpec((t_tile, H), lambda i, j: (i, 0)),        # x
                pl.BlockSpec((H, H), lambda i, j: (0, 0)),             # W1
                pl.BlockSpec((1, H), lambda i, j: (0, 0)),             # b1
                pl.BlockSpec((1, H), lambda i, j: (0, 0)),             # LN gamma
                pl.BlockSpec((1, H), lambda i, j: (0, 0)),             # LN beta
                pl.BlockSpec((H, vocab_tile), lambda i, j: (0, j)),    # W2
                pl.BlockSpec((1, vocab_tile), lambda i, j: (0, j)),    # dec bias
            ],
            out_specs=pl.BlockSpec((t_tile, vocab_tile), lambda i, j: (i, j)),
            scratch_shapes=[pltpu.VMEM((t_tile, H), jnp.bfloat16)],
        ),
        compiler_params=pltpu.CompilerParams(
            # Token tiles shard across TensorCores (v7x megacore win); the
            # vocab axis must stay sequential: h_scratch is written at j==0
            # and reused by every later vocab tile of the same token tile.
            dimension_semantics=("parallel", "arbitrary"),
            vmem_limit_bytes=vmem_limit,
        ),
    )(x2d, w1_bf, b1_2d, gamma_2d, beta_2d, w2_bf, dbias_2d)

    return out[:T, :V].reshape(B, S, V)


def reference(x, w1, b1, gamma, beta, w2, dbias):
    h = jnp.einsum("bsh,hk->bsk", x, w1) + b1
    h = _gelu_erf(h)
    mean = jnp.mean(h, axis=-1, keepdims=True)
    var = jnp.mean((h - mean) ** 2, axis=-1, keepdims=True)
    h = (h - mean) * jax.lax.rsqrt(var + LAYER_NORM_EPS) * gamma + beta
    return jnp.einsum("bsh,hv->bsv", h, w2) + dbias


if __name__ == "__main__":
    # Small synthetic DeBERTa-v2 head. Shapes intentionally not tile-aligned
    # (T = 144, V = 1000) to exercise the padding + multi-tile grid path.
    B, S, H, V = 2, 72, 256, 1000

    key = jax.random.PRNGKey(0)
    k_x, k_w1, k_b1, k_w2 = jax.random.split(key, 4)

    x = jax.random.normal(k_x, (B, S, H), dtype=jnp.float32)

    # Parameter shapes per module __init__:
    #   transform.dense: Linear(H, H)            -> w1 (H,H), b1 (H,)
    #   transform.LayerNorm(H)                   -> gamma (H,), beta (H,)
    #   decoder: Linear(H, V, bias=False) + bias -> w2 (H,V), dbias (V,)
    w1 = jax.random.normal(k_w1, (H, H), dtype=jnp.float32) * 0.02
    b1 = jax.random.normal(k_b1, (H,), dtype=jnp.float32) * 0.02
    gamma = jnp.ones((H,), dtype=jnp.float32)
    beta = jnp.zeros((H,), dtype=jnp.float32)
    w2 = jax.random.normal(k_w2, (H, V), dtype=jnp.float32) * 0.02
    dbias = jnp.zeros((V,), dtype=jnp.float32)  # nn.Parameter(torch.zeros(vocab_size))

    # Small tiles so the tiny test actually exercises a (3, 4) grid.
    scores = deberta_mlm_head(x, w1, b1, gamma, beta, w2, dbias,
                              t_tile=64, vocab_tile=256)
    scores = jax.block_until_ready(scores)

    ref = reference(x, w1, b1, gamma, beta, w2, dbias)
    assert scores.shape == (B, S, V)
    # bf16 MXU operands (f32 accumulation / LayerNorm stats) -> looser tolerance
    # than the pure-f32 variant.
    assert jnp.allclose(scores, ref, atol=5e-2, rtol=5e-2), (
        float(jnp.max(jnp.abs(scores - ref))))

    print("KERNEL_OK")
</pallas_src>

<mosaic_0001>
module attributes {stable_mosaic.version = 11 : i64} {
  func.func @mlm_head_kernel(%arg0: i32, %arg1: i32, %arg2: memref<64x256xbf16, #tpu.memory_space<vmem>>, %arg3: memref<256x256xbf16, #tpu.memory_space<vmem>>, %arg4: memref<1x256xf32, #tpu.memory_space<vmem>>, %arg5: memref<1x256xf32, #tpu.memory_space<vmem>>, %arg6: memref<1x256xf32, #tpu.memory_space<vmem>>, %arg7: memref<256x256xbf16, #tpu.memory_space<vmem>>, %arg8: memref<1x256xf32, #tpu.memory_space<vmem>>, %arg9: memref<64x256xf32, #tpu.memory_space<vmem>>, %arg10: memref<64x256xbf16, #tpu.memory_space<vmem>>) attributes {dimension_semantics = [#tpu.dimension_semantics<parallel>, #tpu.dimension_semantics<arbitrary>], iteration_bounds = array<i64: 3, 4>, scalar_prefetch = 0 : i64, scratch_operands = 1 : i64, tpu.core_type = #tpu.core_type<tc>, window_params = [{transform_indices = @transform_0, window_bounds = array<i64: 64, 256>}, {pipeline_mode = #tpu.pipeline_mode<synchronous>, transform_indices = @transform_1, window_bounds = array<i64: 256, 256>}, {pipeline_mode = #tpu.pipeline_mode<synchronous>, transform_indices = @transform_2, window_bounds = array<i64: 1, 256>}, {pipeline_mode = #tpu.pipeline_mode<synchronous>, transform_indices = @transform_3, window_bounds = array<i64: 1, 256>}, {pipeline_mode = #tpu.pipeline_mode<synchronous>, transform_indices = @transform_4, window_bounds = array<i64: 1, 256>}, {transform_indices = @transform_5, window_bounds = array<i64: 256, 256>}, {transform_indices = @transform_6, window_bounds = array<i64: 1, 256>}, {transform_indices = @transform_7, window_bounds = array<i64: 64, 256>}]} {
    %c0_i32 = arith.constant 0 : i32
    %0 = arith.cmpi eq, %arg1, %c0_i32 : i32
    %1 = arith.extui %0 : i1 to i32
    %c0_i32_0 = arith.constant 0 : i32
    %2 = arith.cmpi ne, %1, %c0_i32_0 : i32
    scf.if %2 {
      %c0_8 = arith.constant 0 : index
      %c0_9 = arith.constant 0 : index
      %10 = vector.load %arg2[%c0_8, %c0_9] : memref<64x256xbf16, #tpu.memory_space<vmem>>, vector<64x256xbf16>
      %c0_10 = arith.constant 0 : index
      %c0_11 = arith.constant 0 : index
      %11 = vector.load %arg3[%c0_10, %c0_11] : memref<256x256xbf16, #tpu.memory_space<vmem>>, vector<256x256xbf16>
      %cst_12 = arith.constant dense<0.000000e+00> : vector<64x256xf32>
      %12 = tpu.matmul %10, %11, %cst_12 {dimension_numbers = #tpu.dot_dimension_numbers<[1], [0], [0], [1], [0, 0, 1, 1], [], []>} : vector<64x256xbf16>, vector<256x256xbf16>, vector<64x256xf32> -> vector<64x256xf32>
      %c0_13 = arith.constant 0 : index
      %c0_14 = arith.constant 0 : index
      %13 = vector.load %arg4[%c0_13, %c0_14] : memref<1x256xf32, #tpu.memory_space<vmem>>, vector<1x256xf32>
      %14 = vector.broadcast %13 : vector<1x256xf32> to vector<64x256xf32>
      %15 = arith.addf %12, %14 : vector<64x256xf32>
      %cst_15 = arith.constant 5.000000e-01 : f32
      %16 = vector.broadcast %cst_15 : f32 to vector<64x256xf32>
      %17 = arith.mulf %15, %16 : vector<64x256xf32>
      %cst_16 = arith.constant 2.000000e+00 : f32
      %18 = math.sqrt %cst_16 : f32
      %19 = vector.broadcast %18 : f32 to vector<64x256xf32>
      %20 = arith.divf %15, %19 : vector<64x256xf32>
      %21 = math.erf %20 : vector<64x256xf32>
      %cst_17 = arith.constant 1.000000e+00 : f32
      %22 = vector.broadcast %cst_17 : f32 to vector<64x256xf32>
      %23 = arith.addf %22, %21 : vector<64x256xf32>
      %24 = arith.mulf %17, %23 : vector<64x256xf32>
      %cst_18 = arith.constant dense<0.000000e+00> : vector<64xf32>
      %25 = vector.multi_reduction <add>, %24, %cst_18 [1] : vector<64x256xf32> to vector<64xf32>
      %26 = vector.shape_cast %25 : vector<64xf32> to vector<64x1xf32>
      %cst_19 = arith.constant 2.560000e+02 : f32
      %27 = vector.broadcast %cst_19 : f32 to vector<64x1xf32>
      %28 = arith.divf %26, %27 : vector<64x1xf32>
      %29 = vector.broadcast %28 : vector<64x1xf32> to vector<64x256xf32>
      %30 = arith.subf %24, %29 : vector<64x256xf32>
      %31 = arith.mulf %30, %30 : vector<64x256xf32>
      %cst_20 = arith.constant dense<0.000000e+00> : vector<64xf32>
      %32 = vector.multi_reduction <add>, %31, %cst_20 [1] : vector<64x256xf32> to vector<64xf32>
      %33 = vector.shape_cast %32 : vector<64xf32> to vector<64x1xf32>
      %cst_21 = arith.constant 2.560000e+02 : f32
      %34 = vector.broadcast %cst_21 : f32 to vector<64x1xf32>
      %35 = arith.divf %33, %34 : vector<64x1xf32>
      %cst_22 = arith.constant 1.000000e-07 : f32
      %36 = vector.broadcast %cst_22 : f32 to vector<64x1xf32>
      %37 = arith.addf %35, %36 : vector<64x1xf32>
      %38 = math.rsqrt %37 : vector<64x1xf32>
      %39 = vector.broadcast %38 : vector<64x1xf32> to vector<64x256xf32>
      %40 = arith.mulf %30, %39 : vector<64x256xf32>
      %c0_23 = arith.constant 0 : index
      %c0_24 = arith.constant 0 : index
      %41 = vector.load %arg5[%c0_23, %c0_24] : memref<1x256xf32, #tpu.memory_space<vmem>>, vector<1x256xf32>
      %42 = vector.broadcast %41 : vector<1x256xf32> to vector<64x256xf32>
      %43 = arith.mulf %40, %42 : vector<64x256xf32>
      %c0_25 = arith.constant 0 : index
      %c0_26 = arith.constant 0 : index
      %44 = vector.load %arg6[%c0_25, %c0_26] : memref<1x256xf32, #tpu.memory_space<vmem>>, vector<1x256xf32>
      %45 = vector.broadcast %44 : vector<1x256xf32> to vector<64x256xf32>
      %46 = arith.addf %43, %45 : vector<64x256xf32>
      %47 = arith.truncf %46 : vector<64x256xf32> to vector<64x256xbf16>
      %c0_27 = arith.constant 0 : index
      %c0_28 = arith.constant 0 : index
      %48 = vector.load %arg10[%c0_27, %c0_28] : memref<64x256xbf16, #tpu.memory_space<vmem>>, vector<64x256xbf16>
      tpu.vector_store %arg10[%c0_27, %c0_28], %47 {strides = array<i32>} : memref<64x256xbf16, #tpu.memory_space<vmem>>, vector<64x256xbf16>,
    } else {
    }
    %c0 = arith.constant 0 : index
    %c0_1 = arith.constant 0 : index
    %3 = vector.load %arg10[%c0, %c0_1] : memref<64x256xbf16, #tpu.memory_space<vmem>>, vector<64x256xbf16>
    %c0_2 = arith.constant 0 : index
    %c0_3 = arith.constant 0 : index
    %4 = vector.load %arg7[%c0_2, %c0_3] : memref<256x256xbf16, #tpu.memory_space<vmem>>, vector<256x256xbf16>
    %cst = arith.constant dense<0.000000e+00> : vector<64x256xf32>
    %5 = tpu.matmul %3, %4, %cst {dimension_numbers = #tpu.dot_dimension_numbers<[1], [0], [0], [1], [0, 0, 1, 1], [], []>} : vector<64x256xbf16>, vector<256x256xbf16>, vector<64x256xf32> -> vector<64x256xf32>
    %c0_4 = arith.constant 0 : index
    %c0_5 = arith.constant 0 : index
    %6 = vector.load %arg8[%c0_4, %c0_5] : memref<1x256xf32, #tpu.memory_space<vmem>>, vector<1x256xf32>
    %7 = vector.broadcast %6 : vector<1x256xf32> to vector<64x256xf32>
    %8 = arith.addf %5, %7 : vector<64x256xf32>
    %c0_6 = arith.constant 0 : index
    %c0_7 = arith.constant 0 : index
    %9 = vector.load %arg9[%c0_6, %c0_7] : memref<64x256xf32, #tpu.memory_space<vmem>>, vector<64x256xf32>
    tpu.vector_store %arg9[%c0_6, %c0_7], %8 {strides = array<i32>} : memref<64x256xf32, #tpu.memory_space<vmem>>, vector<64x256xf32>,
    return
  }
  func.func @transform_0(%arg0: i32, %arg1: i32) -> (i32, i32) {
    %c0_i32 = arith.constant 0 : i32
    %c0_i32_0 = arith.constant 0 : i32
    return %arg0, %c0_i32 : i32, i32
  }
  func.func @transform_1(%arg0: i32, %arg1: i32) -> (i32, i32) {
    %c0_i32 = arith.constant 0 : i32
    %c0_i32_0 = arith.constant 0 : i32
    %c0_i32_1 = arith.constant 0 : i32
    return %c0_i32, %c0_i32_0 : i32, i32
  }
  func.func @transform_2(%arg0: i32, %arg1: i32) -> (i32, i32) {
    %c0_i32 = arith.constant 0 : i32
    %c0_i32_0 = arith.constant 0 : i32
    %c0_i32_1 = arith.constant 0 : i32
    return %c0_i32, %c0_i32_0 : i32, i32
  }
  func.func @transform_3(%arg0: i32, %arg1: i32) -> (i32, i32) {
    %c0_i32 = arith.constant 0 : i32
    %c0_i32_0 = arith.constant 0 : i32
    %c0_i32_1 = arith.constant 0 : i32
    return %c0_i32, %c0_i32_0 : i32, i32
  }
  func.func @transform_4(%arg0: i32, %arg1: i32) -> (i32, i32) {
    %c0_i32 = arith.constant 0 : i32
    %c0_i32_0 = arith.constant 0 : i32
    %c0_i32_1 = arith.constant 0 : i32
    return %c0_i32, %c0_i32_0 : i32, i32
  }
  func.func @transform_5(%arg0: i32, %arg1: i32) -> (i32, i32) {
    %c0_i32 = arith.constant 0 : i32
    %c0_i32_0 = arith.constant 0 : i32
    return %c0_i32, %arg1 : i32, i32
  }
  func.func @transform_6(%arg0: i32, %arg1: i32) -> (i32, i32) {
    %c0_i32 = arith.constant 0 : i32
    %c0_i32_0 = arith.constant 0 : i32
    return %c0_i32, %arg1 : i32, i32
  }
  func.func @transform_7(%arg0: i32, %arg1: i32) -> (i32, i32) {
    %c0_i32 = arith.constant 0 : i32
    return %arg0, %arg1 : i32, i32
  }
}

</mosaic_0001>

<llo_original>
// kernel: tpu_custom_call.1
$region0: #{tpu_custom_call.1}
  #allocation0 [shape = 'u32[]', space=smem, size = 0x4, offset = 0x4, fixed_abs, tag = 'smem constant byte address 0x4 - core index']
  #allocation1 [shape = 'u32[72,128]{1,0:T(1,128)}', space=vmem, size = 0x9000, scoped, tag = 'internal scratch']
  #allocation2 [shape = 'bf16[64,256]{1,0:T(8,128)(2,1)}', space=vmem, size = 0x8000, scoped, tag = 'scratch operand']
  %s0 = inlined_call_operand.hbm [shape: bf16[192,256], index: 0, kind: input, shape index: {}]
  %s1 = inlined_call_operand.hbm [shape: bf16[256,256], index: 1, kind: input, shape index: {}]
  %s2 = inlined_call_operand.hbm [shape: f32[1,256], index: 2, kind: input, shape index: {}]
  %s3 = inlined_call_operand.vmem [shape: f32[1,256], index: 3, kind: input, shape index: {}]
  %s4 = inlined_call_operand.hbm [shape: f32[1,256], index: 4, kind: input, shape index: {}]
  %s5 = inlined_call_operand.hbm [shape: bf16[256,1024], index: 5, kind: input, shape index: {}]
  %s6 = inlined_call_operand.hbm [shape: f32[1,1024], index: 6, kind: input, shape index: {}]
  %s7 = inlined_call_operand.hbm [shape: f32[192,1024], index: 7, kind: output, shape index: {}]
  %s8 = sld [smem:[#allocation0]]
  $region89: #{tpu_custom_call.1} parent=0
    _
  %s10 = ssub.s32 1, %s8
  %s11 = scalar_select 0, %s10, %s8
  $region1: #{tpu_custom_call.1} parent=0
    #allocation3 [shape = 'u8[65536]{0}', space=vmem, size = 0x10000, scoped, tag = 'input window, operand 0']
    #allocation4 [shape = 's32[2]{0}', space=sflag, size = 0x8, scoped, tag = 'scoped memory for tpu_custom_call.1']
    #allocation5 [shape = 's32[2]{0}', space=sflag, size = 0x8, scoped, tag = 'scoped memory for tpu_custom_call.1']
    #allocation6 [shape = 'u8[131072]{0}', space=vmem, size = 0x20000, scoped, tag = 'input window, operand 1, single buffered']
    #allocation7 [shape = 's32[1]{0}', space=sflag, size = 0x4, scoped, tag = 'scoped memory for tpu_custom_call.1']
    #allocation8 [shape = 'u8[1024]{0}', space=vmem, size = 0x400, scoped, tag = 'input window, operand 2, single buffered']
    #allocation9 [shape = 'u8[1024]{0}', space=vmem, size = 0x400, scoped, tag = 'input window, operand 4, single buffered']
    #allocation10 [shape = 's32[1]{0}', space=sflag, size = 0x4, scoped, tag = 'scoped memory for tpu_custom_call.1']
    #allocation11 [shape = 'u8[262144]{0}', space=vmem, size = 0x40000, scoped, tag = 'input window, operand 5']
    #allocation12 [shape = 'u8[2048]{0}', space=vmem, size = 0x800, scoped, tag = 'input window, operand 6']
    #allocation13 [shape = 'u8[131072]{0}', space=vmem, size = 0x20000, scoped, tag = 'output window, operand 0']
    %12 = vsyncpa [#allocation4], 0
    %s13 = scalar_lea.sflag [#allocation4], 1
    %14 = vsyncpa %s13, 0
    %15 = vsyncpa [#allocation7], 0
    %16 = vsyncpa [#allocation10], 0
    %17 = vsyncpa [#allocation5], 0
    %s18 = scalar_lea.sflag [#allocation5], 1
    %19 = vsyncpa %s18, 0
    loop: start=0, step=1, limit=14
    $region2: #{tpu_custom_call.1} parent=1 // loop_pre_header
      _
    $region3: #{tpu_custom_call.1} parent=1 // loop_header
      %s21 = sphi 0, %s25
      %p22 = scmp.ge.s32.totalorder %s21, 14
      %s28 = sphi 0, %s40
      %s29 = sphi 0, %s36
      %s30 = sphi 0, %s28
      %s31 = sphi 0, %s29
      %s32 = sphi 0, %s30
      %s33 = sphi 0, %s31
      %s43 = sphi 0, %s45
      %s46 = sphi 0, %s43
      %s47 = sphi 0, %s46
      %s63 = sphi 0, %s47
      %s67 = sphi 0, %s67
      %s69 = sphi 0, %s67
      %s70 = sphi 0, %s69
      %s84 = sphi 0, %s70
      %s88 = sphi 0, %s88
      %s90 = sphi 0, %s88
      %s91 = sphi 0, %s90
      %s105 = sphi 0, %s91
      %s109 = sphi 0, %s109
      %s111 = sphi 0, %s109
      %s112 = sphi 0, %s111
      %s126 = sphi 0, %s112
      %s130 = sphi 0, %s130
      %s132 = sphi 0, %s130
      %s133 = sphi 0, %s132
      %s147 = sphi 0, %s133
      %s153 = sphi 0, %s155
      %s156 = sphi 0, %s153
      %s157 = sphi 0, %s156
      %s173 = sphi 0, %s157
      %s179 = sphi 0, %s181
      %s182 = sphi 0, %s179
      %s183 = sphi 0, %s182
      %s199 = sphi 0, %s183
      %s207 = sphi 0, %s209
      %s210 = sphi 0, %s207
      %s211 = sphi 0, %s210
      %s227 = sphi 0, %s211
    $region4: #{tpu_custom_call.1} parent=1 // loop_header_branch
      %24 = sbr.rel (%p22) target = $region8
    $region5: #{tpu_custom_call.1} parent=1 // loop_body
      %s26 = ssub.s32 %s21, 1
      %s27 = ssub.s32 %s21, 2
      %s34 = sadd.s32 1, %s29
      %p35 = scmp.ge.s32.totalorder %s34, 4
      %s36 = scalar_select %p35, 0, %s34
      %s37 = sadd.s32 1, %s28
      %s38 = scalar_select %p35, %s37, %s28
      %p39 = scmp.ge.s32.totalorder %s38, 3
      %s40 = scalar_select %p39, 0, %s38
      %s41 = ssub.s32 %s28, %s40
      %p42 = scmp.eq.s32.totalorder %s41, 0
      %s44 = sadd.s32 %s43, 1
      %s45 = scalar_select %p42, %s43, %s44
      %p48 = pneg %p42
      %p49 = scmp.eq.s32.totalorder %s21, 11
      %p50 = por %p48, %p49
      %p51 = scmp.ne.s32.totalorder %s43, %s46
      %p52 = scmp.eq.s32.totalorder %s21, 0
      %p53 = por %p51, %p52
      %p54 = scmp.ne.s32.totalorder %s43, %s46
      %p55 = scmp.eq.s32.totalorder %s26, 11
      %p56 = por %p54, %p55
      %p57 = scmp.ne.s32.totalorder %s46, %s47
      %p58 = scmp.eq.s32.totalorder %s26, 0
      %p59 = por %p57, %p58
      %p60 = scmp.ne.s32.totalorder %s46, %s47
      %p61 = scmp.eq.s32.totalorder %s27, 11
      %p62 = por %p60, %p61
      %p64 = scmp.ne.s32.totalorder %s47, %s63
      %p65 = scmp.eq.s32.totalorder %s27, 0
      %p66 = por %p64, %p65
      %s68 = sadd.s32 %s67, 1
      %p71 = scmp.eq.s32.totalorder %s21, 11
      %p72 = scmp.ne.s32.totalorder %s67, %s69
      %p73 = scmp.eq.s32.totalorder %s21, 0
      %p74 = por %p72, %p73
      %p75 = scmp.ne.s32.totalorder %s67, %s69
      %p76 = scmp.eq.s32.totalorder %s26, 11
      %p77 = por %p75, %p76
      %p78 = scmp.ne.s32.totalorder %s69, %s70
      %p79 = scmp.eq.s32.totalorder %s26, 0
      %p80 = por %p78, %p79
      %p81 = scmp.ne.s32.totalorder %s69, %s70
      %p82 = scmp.eq.s32.totalorder %s27, 11
      %p83 = por %p81, %p82
      %p85 = scmp.ne.s32.totalorder %s70, %s84
      %p86 = scmp.eq.s32.totalorder %s27, 0
      %p87 = por %p85, %p86
      %s89 = sadd.s32 %s88, 1
      %p92 = scmp.eq.s32.totalorder %s21, 11
      %p93 = scmp.ne.s32.totalorder %s88, %s90
      %p94 = scmp.eq.s32.totalorder %s21, 0
      %p95 = por %p93, %p94
      %p96 = scmp.ne.s32.totalorder %s88, %s90
      %p97 = scmp.eq.s32.totalorder %s26, 11
      %p98 = por %p96, %p97
      %p99 = scmp.ne.s32.totalorder %s90, %s91
      %p100 = scmp.eq.s32.totalorder %s26, 0
      %p101 = por %p99, %p100
      %p102 = scmp.ne.s32.totalorder %s90, %s91
      %p103 = scmp.eq.s32.totalorder %s27, 11
      %p104 = por %p102, %p103
      %p106 = scmp.ne.s32.totalorder %s91, %s105
      %p107 = scmp.eq.s32.totalorder %s27, 0
      %p108 = por %p106, %p107
      %s110 = sadd.s32 %s109, 1
      %p113 = scmp.eq.s32.totalorder %s21, 11
      %p114 = scmp.ne.s32.totalorder %s109, %s111
      %p115 = scmp.eq.s32.totalorder %s21, 0
      %p116 = por %p114, %p115
      %p117 = scmp.ne.s32.totalorder %s109, %s111
      %p118 = scmp.eq.s32.totalorder %s26, 11
      %p119 = por %p117, %p118
      %p120 = scmp.ne.s32.totalorder %s111, %s112
      %p121 = scmp.eq.s32.totalorder %s26, 0
      %p122 = por %p120, %p121
      %p123 = scmp.ne.s32.totalorder %s111, %s112
      %p124 = scmp.eq.s32.totalorder %s27, 11
      %p125 = por %p123, %p124
      %p127 = scmp.ne.s32.totalorder %s112, %s126
      %p128 = scmp.eq.s32.totalorder %s27, 0
      %p129 = por %p127, %p128
      %s131 = sadd.s32 %s130, 1
      %p134 = scmp.eq.s32.totalorder %s21, 11
      %p135 = scmp.ne.s32.totalorder %s130, %s132
      %p136 = scmp.eq.s32.totalorder %s21, 0
      %p137 = por %p135, %p136
      %p138 = scmp.ne.s32.totalorder %s130, %s132
      %p139 = scmp.eq.s32.totalorder %s26, 11
      %p140 = por %p138, %p139
      %p141 = scmp.ne.s32.totalorder %s132, %s133
      %p142 = scmp.eq.s32.totalorder %s26, 0
      %p143 = por %p141, %p142
      %p144 = scmp.ne.s32.totalorder %s132, %s133
      %p145 = scmp.eq.s32.totalorder %s27, 11
      %p146 = por %p144, %p145
      %p148 = scmp.ne.s32.totalorder %s133, %s147
      %p149 = scmp.eq.s32.totalorder %s27, 0
      %p150 = por %p148, %p149
      %s151 = ssub.s32 %s29, %s36
      %p152 = scmp.eq.s32.totalorder %s151, 0
      %s154 = sadd.s32 %s153, 1
      %s155 = scalar_select %p152, %s153, %s154
      %p158 = pneg %p152
      %p159 = scmp.eq.s32.totalorder %s21, 11
      %p160 = por %p158, %p159
      %p161 = scmp.ne.s32.totalorder %s153, %s156
      %p162 = scmp.eq.s32.totalorder %s21, 0
      %p163 = por %p161, %p162
      %p164 = scmp.ne.s32.totalorder %s153, %s156
      %p165 = scmp.eq.s32.totalorder %s26, 11
      %p166 = por %p164, %p165
      %p167 = scmp.ne.s32.totalorder %s156, %s157
      %p168 = scmp.eq.s32.totalorder %s26, 0
      %p169 = por %p167, %p168
      %p170 = scmp.ne.s32.totalorder %s156, %s157
      %p171 = scmp.eq.s32.totalorder %s27, 11
      %p172 = por %p170, %p171
      %p174 = scmp.ne.s32.totalorder %s157, %s173
      %p175 = scmp.eq.s32.totalorder %s27, 0
      %p176 = por %p174, %p175
      %s177 = ssub.s32 %s29, %s36
      %p178 = scmp.eq.s32.totalorder %s177, 0
      %s180 = sadd.s32 %s179, 1
      %s181 = scalar_select %p178, %s179, %s180
      %p184 = pneg %p178
      %p185 = scmp.eq.s32.totalorder %s21, 11
      %p186 = por %p184, %p185
      %p187 = scmp.ne.s32.totalorder %s179, %s182
      %p188 = scmp.eq.s32.totalorder %s21, 0
      %p189 = por %p187, %p188
      %p190 = scmp.ne.s32.totalorder %s179, %s182
      %p191 = scmp.eq.s32.totalorder %s26, 11
      %p192 = por %p190, %p191
      %p193 = scmp.ne.s32.totalorder %s182, %s183
      %p194 = scmp.eq.s32.totalorder %s26, 0
      %p195 = por %p193, %p194
      %p196 = scmp.ne.s32.totalorder %s182, %s183
      %p197 = scmp.eq.s32.totalorder %s27, 11
      %p198 = por %p196, %p197
      %p200 = scmp.ne.s32.totalorder %s183, %s199
      %p201 = scmp.eq.s32.totalorder %s27, 0
      %p202 = por %p200, %p201
      %s203 = ssub.s32 %s28, %s40
      %s204 = ssub.s32 %s29, %s36
      %s205 = sor.u32 %s203, %s204
      %p206 = scmp.eq.s32.totalorder %s205, 0
      %s208 = sadd.s32 %s207, 1
      %s209 = scalar_select %p206, %s207, %s208
      %p212 = pneg %p206
      %p213 = scmp.eq.s32.totalorder %s21, 11
      %p214 = por %p212, %p213
      %p215 = scmp.ne.s32.totalorder %s207, %s210
      %p216 = scmp.eq.s32.totalorder %s21, 0
      %p217 = por %p215, %p216
      %p218 = scmp.ne.s32.totalorder %s207, %s210
      %p219 = scmp.eq.s32.totalorder %s26, 11
      %p220 = por %p218, %p219
      %p221 = scmp.ne.s32.totalorder %s210, %s211
      %p222 = scmp.eq.s32.totalorder %s26, 0
      %p223 = por %p221, %p222
      %p224 = scmp.ne.s32.totalorder %s210, %s211
      %p225 = scmp.eq.s32.totalorder %s27, 11
      %p226 = por %p224, %p225
      %p228 = scmp.ne.s32.totalorder %s211, %s227
      %p229 = scmp.eq.s32.totalorder %s27, 0
      %p230 = por %p228, %p229
      %p231 = scmp.le.s32.totalorder 1, %s21
      %p232 = scmp.lt.s32.totalorder %s21, 13
      %p233 = pnand %p231, %p232
      %p234 = pneg %p233
      // Predicated region
      $region9: #{tpu_custom_call.1} parent=5 // pred_check
        _
      $region10: #{tpu_custom_call.1} parent=5 // pred_check_branch
        %236 = sbr.rel (%p233) target = $region12
      $region11: #{tpu_custom_call.1} parent=5 // pred_region
        %s237 = ssub.s32 %s21, 1
        // Predicated region
        $region13: #{tpu_custom_call.1} parent=11 // pred_check
          %p238 = pneg %p80
        $region14: #{tpu_custom_call.1} parent=11 // pred_check_branch
          %240 = sbr.rel (%p238) target = $region16
        $region15: #{tpu_custom_call.1} parent=11 // pred_region
          %242 = vsyncadd [#allocation7], 0
          %s243 = sshll.u32 %s1, 4
          %s244 = int_to_ptr.hbm [resolvable:$true] %s243
          %s245 = sshll.u32 [#allocation6], 4
          %s246 = int_to_ptr.vmem [resolvable:$true] %s245
          %251 = dma.hbm_to_vmem [thread:$0]  %s244, 4096, %s246, [#allocation7], 128, 128, 8
        $region16: #{tpu_custom_call.1} parent=11 // pred_fallthru
          _
        // Predicated region
        $region17: #{tpu_custom_call.1} parent=11 // pred_check
          %p252 = pneg %p101
        $region18: #{tpu_custom_call.1} parent=11 // pred_check_branch
          %254 = sbr.rel (%p252) target = $region20
        $region19: #{tpu_custom_call.1} parent=11 // pred_region
          %256 = vsyncadd [#allocation7], 0
          %s258 = sshll.u32 %s2, 4
          %s259 = int_to_ptr.hbm [resolvable:$true] %s258
          %s260 = sshll.u32 [#allocation8], 4
          %s261 = int_to_ptr.vmem [resolvable:$true] %s260
          %263 = dma.hbm_to_vmem [thread:$0]  %s259, 32, %s261, [#allocation7]
        $region20: #{tpu_custom_call.1} parent=11 // pred_fallthru
          _
        // Predicated region
        $region21: #{tpu_custom_call.1} parent=11 // pred_check
          %p264 = pneg %p122
        $region22: #{tpu_custom_call.1} parent=11 // pred_check_branch
          %266 = sbr.rel (%p264) target = $region24
        $region23: #{tpu_custom_call.1} parent=11 // pred_region
          _
        $region24: #{tpu_custom_call.1} parent=11 // pred_fallthru
          _
        // Predicated region
        $region25: #{tpu_custom_call.1} parent=11 // pred_check
          %p267 = pneg %p143
        $region26: #{tpu_custom_call.1} parent=11 // pred_check_branch
          %269 = sbr.rel (%p267) target = $region28
        $region27: #{tpu_custom_call.1} parent=11 // pred_region
          %271 = vsyncadd [#allocation10], 0
          %s273 = sshll.u32 %s4, 4
          %s274 = int_to_ptr.hbm [resolvable:$true] %s273
          %s275 = sshll.u32 [#allocation9], 4
          %s276 = int_to_ptr.vmem [resolvable:$true] %s275
          %278 = dma.hbm_to_vmem [thread:$0]  %s274, 32, %s276, [#allocation10]
        $region28: #{tpu_custom_call.1} parent=11 // pred_fallthru
          _
      $region12: #{tpu_custom_call.1} parent=5 // pred_fallthru
        _
      %p279 = scmp.lt.s32.totalorder %s21, 12
      // Predicated region
      $region29: #{tpu_custom_call.1} parent=5 // pred_check
        %p280 = pneg %p279
      $region30: #{tpu_custom_call.1} parent=5 // pred_check_branch
        %282 = sbr.rel (%p280) target = $region32
      $region31: #{tpu_custom_call.1} parent=5 // pred_region
        // Predicated region
        $region33: #{tpu_custom_call.1} parent=31 // pred_check
          %p283 = pneg %p53
        $region34: #{tpu_custom_call.1} parent=31 // pred_check_branch
          %285 = sbr.rel (%p283) target = $region36
        $region35: #{tpu_custom_call.1} parent=31 // pred_region
          %s286 = sand.u32 %s21, 1
          %s287 = scalar_lea.sflag [#allocation4], %s286
          %s288 = sand.u32 %s43, 1
          %s289 = smul.addr %s288, 64
          %s290 = scalar_lea.vmem [#allocation3], %s289
          %s291 = smul.u32 8, %s28
          %293 = vsyncadd %s287, 0
          %s294 = smul.addr %s291, 2
          %s295 = smul.addr %s294, 4
          %s296 = scalar_lea.hbm %s0, %s295
          %s297 = sshll.u32 %s296, 4
          %s298 = int_to_ptr.hbm [resolvable:$true] %s297
          %s299 = sshll.u32 %s290, 4
          %s300 = int_to_ptr.vmem [resolvable:$true] %s299
          %305 = dma.hbm_to_vmem [thread:$0]  %s298, 1024, %s300, %s287, 128, 128, 8
        $region36: #{tpu_custom_call.1} parent=31 // pred_fallthru
          _
        // Predicated region
        $region37: #{tpu_custom_call.1} parent=31 // pred_check
          %p306 = pneg %p163
        $region38: #{tpu_custom_call.1} parent=31 // pred_check_branch
          %308 = sbr.rel (%p306) target = $region40
        $region39: #{tpu_custom_call.1} parent=31 // pred_region
          %s309 = sand.u32 %s21, 1
          %s310 = scalar_lea.sflag [#allocation4], %s309
          %s311 = sand.u32 %s153, 1
          %s312 = smul.addr %s311, 256
          %s313 = scalar_lea.vmem [#allocation11], %s312
          %s314 = smul.u32 2, %s29
          %316 = vsyncadd %s310, 0
          %s317 = smul.addr %s314, 4
          %s318 = scalar_lea.hbm %s5, %s317
          %s319 = sshll.u32 %s318, 4
          %s320 = int_to_ptr.hbm [resolvable:$true] %s319
          %s321 = sshll.u32 %s313, 4
          %s322 = int_to_ptr.vmem [resolvable:$true] %s321
          %327 = dma.hbm_to_vmem [thread:$0]  %s320, 4096, %s322, %s310, 512, 128, 8
        $region40: #{tpu_custom_call.1} parent=31 // pred_fallthru
          _
        // Predicated region
        $region41: #{tpu_custom_call.1} parent=31 // pred_check
          %p328 = pneg %p189
        $region42: #{tpu_custom_call.1} parent=31 // pred_check_branch
          %330 = sbr.rel (%p328) target = $region44
        $region43: #{tpu_custom_call.1} parent=31 // pred_region
          %s331 = sand.u32 %s21, 1
          %s332 = scalar_lea.sflag [#allocation4], %s331
          %s333 = sand.u32 %s179, 1
          %s334 = smul.addr %s333, 2
          %s335 = scalar_lea.vmem [#allocation12], %s334
          %s336 = smul.u32 2, %s29
          %338 = vsyncadd %s332, 0
          %s339 = scalar_lea.hbm %s6, %s336
          %s341 = sshll.u32 %s339, 4
          %s342 = int_to_ptr.hbm [resolvable:$true] %s341
          %s343 = sshll.u32 %s335, 4
          %s344 = int_to_ptr.vmem [resolvable:$true] %s343
          %346 = dma.hbm_to_vmem [thread:$0]  %s342, 32, %s344, %s332
        $region44: #{tpu_custom_call.1} parent=31 // pred_fallthru
          _
      $region32: #{tpu_custom_call.1} parent=5 // pred_fallthru
        _
      %p347 = scmp.le.s32.totalorder 1, %s21
      %p348 = scmp.lt.s32.totalorder %s21, 13
      %p349 = pnand %p347, %p348
      %p350 = pneg %p349
      // Predicated region
      $region45: #{tpu_custom_call.1} parent=5 // pred_check
        _
      $region46: #{tpu_custom_call.1} parent=5 // pred_check_branch
        %352 = sbr.rel (%p349) target = $region48
      $region47: #{tpu_custom_call.1} parent=5 // pred_region
        %s353 = ssub.s32 %s21, 1
        %s354 = sand.u32 %s26, 1
        %s355 = scalar_lea.sflag [#allocation4], %s354
        %s356 = sand.u32 %s46, 1
        %s357 = smul.addr %s356, 64
        %s358 = scalar_lea.vmem [#allocation3], %s357
        // Predicated region
        $region49: #{tpu_custom_call.1} parent=47 // pred_check
          %p359 = pneg %p59
        $region50: #{tpu_custom_call.1} parent=47 // pred_check_branch
          %361 = sbr.rel (%p359) target = $region52
        $region51: #{tpu_custom_call.1} parent=47 // pred_region
          %363 = dma.done %s355, 1024
        $region52: #{tpu_custom_call.1} parent=47 // pred_fallthru
          _
        // Predicated region
        $region53: #{tpu_custom_call.1} parent=47 // pred_check
          %p364 = pneg %p80
        $region54: #{tpu_custom_call.1} parent=47 // pred_check_branch
          %366 = sbr.rel (%p364) target = $region56
        $region55: #{tpu_custom_call.1} parent=47 // pred_region
          %368 = dma.done [#allocation7], 4096
        $region56: #{tpu_custom_call.1} parent=47 // pred_fallthru
          _
        // Predicated region
        $region57: #{tpu_custom_call.1} parent=47 // pred_check
          %p369 = pneg %p101
        $region58: #{tpu_custom_call.1} parent=47 // pred_check_branch
          %371 = sbr.rel (%p369) target = $region60
        $region59: #{tpu_custom_call.1} parent=47 // pred_region
          %373 = dma.done [#allocation7], 32
        $region60: #{tpu_custom_call.1} parent=47 // pred_fallthru
          _
        // Predicated region
        $region61: #{tpu_custom_call.1} parent=47 // pred_check
          %p374 = pneg %p143
        $region62: #{tpu_custom_call.1} parent=47 // pred_check_branch
          %376 = sbr.rel (%p374) target = $region64
        $region63: #{tpu_custom_call.1} parent=47 // pred_region
          %378 = dma.done [#allocation10], 32
        $region64: #{tpu_custom_call.1} parent=47 // pred_fallthru
          _
        %s379 = sand.u32 %s26, 1
        %s380 = scalar_lea.sflag [#allocation4], %s379
        %s381 = sand.u32 %s156, 1
        %s382 = smul.addr %s381, 256
        %s383 = scalar_lea.vmem [#allocation11], %s382
        // Predicated region
        $region65: #{tpu_custom_call.1} parent=47 // pred_check
          %p384 = pneg %p169
        $region66: #{tpu_custom_call.1} parent=47 // pred_check_branch
          %386 = sbr.rel (%p384) target = $region68
        $region67: #{tpu_custom_call.1} parent=47 // pred_region
          %388 = dma.done %s380, 4096
        $region68: #{tpu_custom_call.1} parent=47 // pred_fallthru
          _
        %s389 = sand.u32 %s26, 1
        %s390 = scalar_lea.sflag [#allocation4], %s389
        %s391 = sand.u32 %s182, 1
        %s392 = smul.addr %s391, 2
        %s393 = scalar_lea.vmem [#allocation12], %s392
        // Predicated region
        $region69: #{tpu_custom_call.1} parent=47 // pred_check
          %p394 = pneg %p195
        $region70: #{tpu_custom_call.1} parent=47 // pred_check_branch
          %396 = sbr.rel (%p394) target = $region72
        $region71: #{tpu_custom_call.1} parent=47 // pred_region
          %398 = dma.done %s390, 32
        $region72: #{tpu_custom_call.1} parent=47 // pred_fallthru
          _
        %s399 = sand.u32 %s26, 1
        %s400 = scalar_lea.sflag [#allocation4], %s399
        %s401 = sand.u32 %s46, 1
        %s402 = smul.addr %s401, 64
        %s403 = scalar_lea.vmem [#allocation3], %s402
        %p404 = pneg %p59
        %p405 = pneg %p56
        %p406 = pneg %p80
        %p407 = pneg %p77
        %p408 = pneg %p101
        %p409 = pneg %p98
        %p410 = pneg %p122
        %p411 = pneg %p119
        %p412 = pneg %p143
        %p413 = pneg %p140
        %s414 = sand.u32 %s26, 1
        %s415 = scalar_lea.sflag [#allocation4], %s414
        %s416 = sand.u32 %s156, 1
        %s417 = smul.addr %s416, 256
        %s418 = scalar_lea.vmem [#allocation11], %s417
        %p419 = pneg %p169
        %p420 = pneg %p166
        %s421 = sand.u32 %s26, 1
        %s422 = scalar_lea.sflag [#allocation4], %s421
        %s423 = sand.u32 %s182, 1
        %s424 = smul.addr %s423, 2
        %s425 = scalar_lea.vmem [#allocation12], %s424
        %p426 = pneg %p195
        %p427 = pneg %p192
        %p428 = pneg %p223
        %p429 = pneg %p220
        %s430 = sand.u32 %s210, 1
        %s431 = scalar_lea.sflag [#allocation5], %s430
        %s432 = sand.u32 %s210, 1
        %s433 = smul.addr %s432, 128
        %s434 = scalar_lea.vmem [#allocation13], %s433
        %s435 = smul.u32 8, %s30
        %s436 = smul.u32 2, %s31
        %s437 = smul.u32 2, %s31
        %s438 = smul.u32 8, %s30
        %s439 = smul.u32 2, %s31
        %p440 = scmp.eq.s32.totalorder %s31, 0
        // Predicated region
        $region73: #{tpu_custom_call.1} parent=47 // pred_check
          %p441 = pneg %p440
        $region74: #{tpu_custom_call.1} parent=47 // pred_check_branch
          %443 = sbr.rel (%p441) target = $region76
        $region75: #{tpu_custom_call.1} parent=47 // pred_region
          %v444 = vld [vmem:[%s358] sm:$0xff]
          %v445 = vld [vmem:[%s358 + $0x8] sm:$0xff]
          %v446 = vld [vmem:[%s358 + $0x10] sm:$0xff]
          %v447 = vld [vmem:[%s358 + $0x18] sm:$0xff]
          %v448 = vld [vmem:[%s358 + $0x20] sm:$0xff]
          %v449 = vld [vmem:[%s358 + $0x28] sm:$0xff]
          %v450 = vld [vmem:[%s358 + $0x30] sm:$0xff]
          %v451 = vld [vmem:[%s358 + $0x38] sm:$0xff]
          %v452 = vld [vmem:[#allocation6] sm:$0xff]
          %v453 = vld [vmem:[#allocation6 + $0x8] sm:$0xff]
          %v454 = vld [vmem:[#allocation6 + $0x10] sm:$0xff]
          %v455 = vld [vmem:[#allocation6 + $0x18] sm:$0xff]
          %v456 = vld [vmem:[#allocation6 + $0x20] sm:$0xff]
          %v457 = vld [vmem:[#allocation6 + $0x28] sm:$0xff]
          %v458 = vld [vmem:[#allocation6 + $0x30] sm:$0xff]
          %v459 = vld [vmem:[#allocation6 + $0x38] sm:$0xff]
          %v460 = vld [vmem:[#allocation6 + $0x40] sm:$0xff]
          %v461 = vld [vmem:[#allocation6 + $0x48] sm:$0xff]
          %v462 = vld [vmem:[#allocation6 + $0x50] sm:$0xff]
          %v463 = vld [vmem:[#allocation6 + $0x58] sm:$0xff]
          %v464 = vld [vmem:[#allocation6 + $0x60] sm:$0xff]
          %v465 = vld [vmem:[#allocation6 + $0x68] sm:$0xff]
          %v466 = vld [vmem:[#allocation6 + $0x70] sm:$0xff]
          %v467 = vld [vmem:[#allocation6 + $0x78] sm:$0xff]
          %v468 = vld [vmem:[#allocation6 + $0x80] sm:$0xff]
          %v469 = vld [vmem:[#allocation6 + $0x88] sm:$0xff]
          %v470 = vld [vmem:[#allocation6 + $0x90] sm:$0xff]
          %v471 = vld [vmem:[#allocation6 + $0x98] sm:$0xff]
          %v472 = vld [vmem:[#allocation6 + $0xa0] sm:$0xff]
          %v473 = vld [vmem:[#allocation6 + $0xa8] sm:$0xff]
          %v474 = vld [vmem:[#allocation6 + $0xb0] sm:$0xff]
          %v475 = vld [vmem:[#allocation6 + $0xb8] sm:$0xff]
          %v476 = vld [vmem:[#allocation6 + $0xc0] sm:$0xff]
          %v477 = vld [vmem:[#allocation6 + $0xc8] sm:$0xff]
          %v478 = vld [vmem:[#allocation6 + $0xd0] sm:$0xff]
          %v479 = vld [vmem:[#allocation6 + $0xd8] sm:$0xff]
          %v480 = vld [vmem:[#allocation6 + $0xe0] sm:$0xff]
          %v481 = vld [vmem:[#allocation6 + $0xe8] sm:$0xff]
          %v482 = vld [vmem:[#allocation6 + $0xf0] sm:$0xff]
          %v483 = vld [vmem:[#allocation6 + $0xf8] sm:$0xff]
          %v484 = vld [vmem:[#allocation8] sm:$0x3]
          %v486 = vperm.slane %v484, 0
          %v487 = vperm.slane %v484, 1
          %v498 = vunpack.c.l.b16 %v444
          %v499 = vunpack.c.h.b16 %v444
          %v500 = vunpack.c.l.b16 %v445
          %v501 = vunpack.c.h.b16 %v445
          %v502 = vunpack.c.l.b16 %v446
          %v503 = vunpack.c.h.b16 %v446
          %v504 = vunpack.c.l.b16 %v447
          %v505 = vunpack.c.h.b16 %v447
          %v506 = vunpack.c.l.b16 %v448
          %v507 = vunpack.c.h.b16 %v448
          %v508 = vunpack.c.l.b16 %v449
          %v509 = vunpack.c.h.b16 %v449
          %v510 = vunpack.c.l.b16 %v450
          %v511 = vunpack.c.h.b16 %v450
          %v512 = vunpack.c.l.b16 %v451
          %v513 = vunpack.c.h.b16 %v451
          %v514 = vpack.c.b16 %v500, %v498
          %v515 = vpack.c.b16 %v501, %v499
          %v516 = vpack.c.b16 %v504, %v502
          %v517 = vpack.c.b16 %v505, %v503
          %v518 = vpack.c.b16 %v508, %v506
          %v519 = vpack.c.b16 %v509, %v507
          %v520 = vpack.c.b16 %v512, %v510
          %v521 = vpack.c.b16 %v513, %v511
          %v562 = vunpack.c.l.b16 %v452
          %v563 = vunpack.c.h.b16 %v452
          %v564 = vunpack.c.l.b16 %v453
          %v565 = vunpack.c.h.b16 %v453
          %v566 = vunpack.c.l.b16 %v454
          %v567 = vunpack.c.h.b16 %v454
          %v568 = vunpack.c.l.b16 %v455
          %v569 = vunpack.c.h.b16 %v455
          %v570 = vunpack.c.l.b16 %v456
          %v571 = vunpack.c.h.b16 %v456
          %v572 = vunpack.c.l.b16 %v457
          %v573 = vunpack.c.h.b16 %v457
          %v574 = vunpack.c.l.b16 %v458
          %v575 = vunpack.c.h.b16 %v458
          %v576 = vunpack.c.l.b16 %v459
          %v577 = vunpack.c.h.b16 %v459
          %v578 = vunpack.c.l.b16 %v460
          %v579 = vunpack.c.h.b16 %v460
          %v580 = vunpack.c.l.b16 %v461
          %v581 = vunpack.c.h.b16 %v461
          %v582 = vunpack.c.l.b16 %v462
          %v583 = vunpack.c.h.b16 %v462
          %v584 = vunpack.c.l.b16 %v463
          %v585 = vunpack.c.h.b16 %v463
          %v586 = vunpack.c.l.b16 %v464
          %v587 = vunpack.c.h.b16 %v464
          %v588 = vunpack.c.l.b16 %v465
          %v589 = vunpack.c.h.b16 %v465
          %v590 = vunpack.c.l.b16 %v466
          %v591 = vunpack.c.h.b16 %v466
          %v592 = vunpack.c.l.b16 %v467
          %v593 = vunpack.c.h.b16 %v467
          %v594 = vunpack.c.l.b16 %v468
          %v595 = vunpack.c.h.b16 %v468
          %v596 = vunpack.c.l.b16 %v469
          %v597 = vunpack.c.h.b16 %v469
          %v598 = vunpack.c.l.b16 %v470
          %v599 = vunpack.c.h.b16 %v470
          %v600 = vunpack.c.l.b16 %v471
          %v601 = vunpack.c.h.b16 %v471
          %v602 = vunpack.c.l.b16 %v472
          %v603 = vunpack.c.h.b16 %v472
          %v604 = vunpack.c.l.b16 %v473
          %v605 = vunpack.c.h.b16 %v473
          %v606 = vunpack.c.l.b16 %v474
          %v607 = vunpack.c.h.b16 %v474
          %v608 = vunpack.c.l.b16 %v475
          %v609 = vunpack.c.h.b16 %v475
          %v610 = vunpack.c.l.b16 %v476
          %v611 = vunpack.c.h.b16 %v476
          %v612 = vunpack.c.l.b16 %v477
          %v613 = vunpack.c.h.b16 %v477
          %v614 = vunpack.c.l.b16 %v478
          %v615 = vunpack.c.h.b16 %v478
          %v616 = vunpack.c.l.b16 %v479
          %v617 = vunpack.c.h.b16 %v479
          %v618 = vunpack.c.l.b16 %v480
          %v619 = vunpack.c.h.b16 %v480
          %v620 = vunpack.c.l.b16 %v481
          %v621 = vunpack.c.h.b16 %v481
          %v622 = vunpack.c.l.b16 %v482
          %v623 = vunpack.c.h.b16 %v482
          %v624 = vunpack.c.l.b16 %v483
          %v625 = vunpack.c.h.b16 %v483
          %v626 = vpack.c.b16 %v564, %v562
          %v627 = vpack.c.b16 %v565, %v563
          %v628 = vpack.c.b16 %v568, %v566
          %v629 = vpack.c.b16 %v569, %v567
          %v630 = vpack.c.b16 %v572, %v570
          %v631 = vpack.c.b16 %v573, %v571
          %v632 = vpack.c.b16 %v576, %v574
          %v633 = vpack.c.b16 %v577, %v575
          %v634 = vpack.c.b16 %v580, %v578
          %v635 = vpack.c.b16 %v581, %v579
          %v636 = vpack.c.b16 %v584, %v582
          %v637 = vpack.c.b16 %v585, %v583
          %v638 = vpack.c.b16 %v588, %v586
          %v639 = vpack.c.b16 %v589, %v587
          %v640 = vpack.c.b16 %v592, %v590
          %v641 = vpack.c.b16 %v593, %v591
          %v642 = vpack.c.b16 %v596, %v594
          %v643 = vpack.c.b16 %v597, %v595
          %v644 = vpack.c.b16 %v600, %v598
          %v645 = vpack.c.b16 %v601, %v599
          %v646 = vpack.c.b16 %v604, %v602
          %v647 = vpack.c.b16 %v605, %v603
          %v648 = vpack.c.b16 %v608, %v606
          %v649 = vpack.c.b16 %v609, %v607
          %v650 = vpack.c.b16 %v612, %v610
          %v651 = vpack.c.b16 %v613, %v611
          %v652 = vpack.c.b16 %v616, %v614
          %v653 = vpack.c.b16 %v617, %v615
          %v654 = vpack.c.b16 %v620, %v618
          %v655 = vpack.c.b16 %v621, %v619
          %v656 = vpack.c.b16 %v624, %v622
          %v657 = vpack.c.b16 %v625, %v623
          %690 = vmatpush.bf16.msra.mxu0 %v640
          %691 = vmatpush.bf16.msra.mxu0 %v638
          %692 = vmatpush.bf16.msra.mxu0 %v636
          %693 = vmatpush.bf16.msra.mxu0 %v634
          %694 = vmatpush.bf16.msra.mxu0 %v632
          %695 = vmatpush.bf16.msra.mxu0 %v630
          %696 = vmatpush.bf16.msra.mxu0 %v628
          %697 = vmatpush.bf16.msra.mxu0 %v626
          %698 = vmatmul.bf16.gmra.mxu0 %v514
          %v699 = vpop.f32.mrf.mxu0
          %v700 = vadd.f32 %v486, %v699
          %v701 = vpop.f32.mrf.mxu0
          %v702 = vadd.f32 %v486, %v701
          %703 = vmatmul.bf16.gmra.mxu0 %v516
          %v704 = vpop.f32.mrf.mxu0
          %v705 = vadd.f32 %v486, %v704
          %v706 = vpop.f32.mrf.mxu0
          %v707 = vadd.f32 %v486, %v706
          %708 = vmatmul.bf16.gmra.mxu0 %v518
          %v709 = vpop.f32.mrf.mxu0
          %v710 = vadd.f32 %v486, %v709
          %v711 = vpop.f32.mrf.mxu0
          %v712 = vadd.f32 %v486, %v711
          %713 = vmatmul.bf16.gmra.mxu0 %v520
          %v714 = vpop.f32.mrf.mxu0
          %v715 = vadd.f32 %v486, %v714
          %v716 = vpop.f32.mrf.mxu0
          %v717 = vadd.f32 %v486, %v716
          %718 = vdwg.mxu0
          %719 = vmatpush.bf16.msra.mxu0 %v656
          %720 = vmatpush.bf16.msra.mxu0 %v654
          %721 = vmatpush.bf16.msra.mxu0 %v652
          %722 = vmatpush.bf16.msra.mxu0 %v650
          %723 = vmatpush.bf16.msra.mxu0 %v648
          %724 = vmatpush.bf16.msra.mxu0 %v646
          %725 = vmatpush.bf16.msra.mxu0 %v644
          %726 = vmatpush.bf16.msra.mxu0 %v642
          %727 = vmatmul.bf16.gmra.mxu0 %v515
          %v728 = vpop.f32.mrf.mxu0
          %v729 = vadd.f32 %v700, %v728
          %v730 = vpop.f32.mrf.mxu0
          %v731 = vadd.f32 %v702, %v730
          %732 = vmatmul.bf16.gmra.mxu0 %v517
          %v733 = vpop.f32.mrf.mxu0
          %v734 = vadd.f32 %v705, %v733
          %v735 = vpop.f32.mrf.mxu0
          %v736 = vadd.f32 %v707, %v735
          %737 = vmatmul.bf16.gmra.mxu0 %v519
          %v738 = vpop.f32.mrf.mxu0
          %v739 = vadd.f32 %v710, %v738
          %v740 = vpop.f32.mrf.mxu0
          %v741 = vadd.f32 %v712, %v740
          %742 = vmatmul.bf16.gmra.mxu0 %v521
          %v743 = vpop.f32.mrf.mxu0
          %v744 = vadd.f32 %v715, %v743
          %v745 = vpop.f32.mrf.mxu0
          %v746 = vadd.f32 %v717, %v745
          %747 = vdwg.mxu0
          %748 = vmatpush.bf16.msra.mxu0 %v641
          %749 = vmatpush.bf16.msra.mxu0 %v639
          %750 = vmatpush.bf16.msra.mxu0 %v637
          %751 = vmatpush.bf16.msra.mxu0 %v635
          %752 = vmatpush.bf16.msra.mxu0 %v633
          %753 = vmatpush.bf16.msra.mxu0 %v631
          %754 = vmatpush.bf16.msra.mxu0 %v629
          %755 = vmatpush.bf16.msra.mxu0 %v627
          %756 = vmatmul.bf16.gmra.mxu0 %v514
          %v757 = vpop.f32.mrf.mxu0
          %v758 = vadd.f32 %v487, %v757
          %v759 = vpop.f32.mrf.mxu0
          %v760 = vadd.f32 %v487, %v759
          %761 = vmatmul.bf16.gmra.mxu0 %v516
          %v762 = vpop.f32.mrf.mxu0
          %v763 = vadd.f32 %v487, %v762
          %v764 = vpop.f32.mrf.mxu0
          %v765 = vadd.f32 %v487, %v764
          %766 = vmatmul.bf16.gmra.mxu0 %v518
          %v767 = vpop.f32.mrf.mxu0
          %v768 = vadd.f32 %v487, %v767
          %v769 = vpop.f32.mrf.mxu0
          %v770 = vadd.f32 %v487, %v769
          %771 = vmatmul.bf16.gmra.mxu0 %v520
          %v772 = vpop.f32.mrf.mxu0
          %v773 = vadd.f32 %v487, %v772
          %v774 = vpop.f32.mrf.mxu0
          %v775 = vadd.f32 %v487, %v774
          %776 = vdwg.mxu0
          %777 = vmatpush.bf16.msra.mxu0 %v657
          %778 = vmatpush.bf16.msra.mxu0 %v655
          %779 = vmatpush.bf16.msra.mxu0 %v653
          %780 = vmatpush.bf16.msra.mxu0 %v651
          %781 = vmatpush.bf16.msra.mxu0 %v649
          %782 = vmatpush.bf16.msra.mxu0 %v647
          %783 = vmatpush.bf16.msra.mxu0 %v645
          %784 = vmatpush.bf16.msra.mxu0 %v643
          %785 = vmatmul.bf16.gmra.mxu0 %v515
          %v786 = vpop.f32.mrf.mxu0
          %v787 = vadd.f32 %v758, %v786
          %v788 = vpop.f32.mrf.mxu0
          %v789 = vadd.f32 %v760, %v788
          %790 = vmatmul.bf16.gmra.mxu0 %v517
          %v791 = vpop.f32.mrf.mxu0
          %v792 = vadd.f32 %v763, %v791
          %v793 = vpop.f32.mrf.mxu0
          %v794 = vadd.f32 %v765, %v793
          %795 = vmatmul.bf16.gmra.mxu0 %v519
          %v796 = vpop.f32.mrf.mxu0
          %v797 = vadd.f32 %v768, %v796
          %v798 = vpop.f32.mrf.mxu0
          %v799 = vadd.f32 %v770, %v798
          %800 = vmatmul.bf16.gmra.mxu0 %v521
          %v801 = vpop.f32.mrf.mxu0
          %v802 = vadd.f32 %v773, %v801
          %v803 = vpop.f32.mrf.mxu0
          %v804 = vadd.f32 %v775, %v803
          %805 = vdwg.mxu0
          %v806 = vmul.f32 %v729, 0.5
          %v807 = vmul.f32 %v787, 0.5
          %v808 = vmul.f32 %v731, 0.5
          %v809 = vmul.f32 %v789, 0.5
          %v810 = vmul.f32 %v734, 0.5
          %v811 = vmul.f32 %v792, 0.5
          %v812 = vmul.f32 %v736, 0.5
          %v813 = vmul.f32 %v794, 0.5
          %v814 = vmul.f32 %v739, 0.5
          %v815 = vmul.f32 %v797, 0.5
          %v816 = vmul.f32 %v741, 0.5
          %v817 = vmul.f32 %v799, 0.5
          %v818 = vmul.f32 %v744, 0.5
          %v819 = vmul.f32 %v802, 0.5
          %v820 = vmul.f32 %v746, 0.5
          %v821 = vmul.f32 %v804, 0.5
          %v822 = vrcp.pop 1.4142135
          %v823 = vmul.f32 1.4142135, %v822
          %v824 = vsub.f32 1.0, %v823
          %v825 = vmul.f32 %v822, %v824
          %v826 = vadd.f32 %v822, %v825
          %vm827 = vweird.f32 %v822
          %v828 = vsel %vm827, %v822, %v826
          %v829 = vmul.f32 %v729, %v828
          %v830 = vmul.f32 %v787, %v828
          %v831 = vmul.f32 %v731, %v828
          %v832 = vmul.f32 %v789, %v828
          %v833 = vmul.f32 %v734, %v828
          %v834 = vmul.f32 %v792, %v828
          %v835 = vmul.f32 %v736, %v828
          %v836 = vmul.f32 %v794, %v828
          %v837 = vmul.f32 %v739, %v828
          %v838 = vmul.f32 %v797, %v828
          %v839 = vmul.f32 %v741, %v828
          %v840 = vmul.f32 %v799, %v828
          %v841 = vmul.f32 %v744, %v828
          %v842 = vmul.f32 %v802, %v828
          %v843 = vmul.f32 %v746, %v828
          %v844 = vmul.f32 %v804, %v828
          %v845 = vmul.f32 %v829, %v829
          %v846 = vmin.f32 16.0, %v845
          %v847 = vmul.f32 %v846, 2.1237322e-06
          %v848 = vadd.f32 %v847, 0.00028619796
          %v849 = vmul.f32 %v846, %v848
          %v850 = vadd.f32 %v849, 0.0036580483
          %v851 = vmul.f32 %v846, %v850
          %v852 = vadd.f32 %v851, 0.05243302
          %v853 = vmul.f32 %v846, %v852
          %v854 = vadd.f32 %v853, 0.18741608
          %v855 = vmul.f32 %v846, %v854
          %v856 = vadd.f32 %v855, 1.1283791
          %v857 = vmul.f32 %v829, %v856
          %v858 = vmul.f32 %v846, 3.8918573e-05
          %v859 = vadd.f32 %v858, 0.001143296
          %v860 = vmul.f32 %v846, %v859
          %v861 = vadd.f32 %v860, 0.014752088
          %v862 = vmul.f32 %v846, %v861
          %v863 = vadd.f32 %v862, 0.112945676
          %v864 = vmul.f32 %v846, %v863
          %v865 = vadd.f32 %v864, 0.4994258
          %v866 = vmul.f32 %v846, %v865
          %v867 = vadd.f32 %v866, 1.0
          %v868 = vrcp.pop %v867
          %v869 = vmul.f32 %v867, %v868
          %v870 = vsub.f32 1.0, %v869
          %v871 = vmul.f32 %v868, %v870
          %v872 = vadd.f32 %v868, %v871
          %vm873 = vweird.f32 %v867
          %vm874 = vweird.f32 %v868
          %vm875 = vmor %vm873, %vm874
          %v876 = vsel %vm875, %v868, %v872
          %v877 = vand.u32 2147483647, %v867
          %vm878 = vcmp.eq.f32.partialorder %v877, 8.507059e+37
          %v879 = vand.u32 %v867, 2147483648
          %v880 = vor.u32 1.1754944e-38, %v879
          %v881 = vsel %vm878, %v880, %v876
          %v882 = vmul.f32 %v857, %v881
          %v883 = vmin.f32 %v882, 1.0
          %v884 = vmax.f32 %v883, -1.0
          %v885 = vmul.f32 %v830, %v830
          %v886 = vmin.f32 16.0, %v885
          %v887 = vmul.f32 %v886, 2.1237322e-06
          %v888 = vadd.f32 %v887, 0.00028619796
          %v889 = vmul.f32 %v886, %v888
          %v890 = vadd.f32 %v889, 0.0036580483
          %v891 = vmul.f32 %v886, %v890
          %v892 = vadd.f32 %v891, 0.05243302
          %v893 = vmul.f32 %v886, %v892
          %v894 = vadd.f32 %v893, 0.18741608
          %v895 = vmul.f32 %v886, %v894
          %v896 = vadd.f32 %v895, 1.1283791
          %v897 = vmul.f32 %v830, %v896
          %v898 = vmul.f32 %v886, 3.8918573e-05
          %v899 = vadd.f32 %v898, 0.001143296
          %v900 = vmul.f32 %v886, %v899
          %v901 = vadd.f32 %v900, 0.014752088
          %v902 = vmul.f32 %v886, %v901
          %v903 = vadd.f32 %v902, 0.112945676
          %v904 = vmul.f32 %v886, %v903
          %v905 = vadd.f32 %v904, 0.4994258
          %v906 = vmul.f32 %v886, %v905
          %v907 = vadd.f32 %v906, 1.0
          %v908 = vrcp.pop %v907
          %v909 = vmul.f32 %v907, %v908
          %v910 = vsub.f32 1.0, %v909
          %v911 = vmul.f32 %v908, %v910
          %v912 = vadd.f32 %v908, %v911
          %vm913 = vweird.f32 %v907
          %vm914 = vweird.f32 %v908
          %vm915 = vmor %vm913, %vm914
          %v916 = vsel %vm915, %v908, %v912
          %v917 = vand.u32 2147483647, %v907
          %vm918 = vcmp.eq.f32.partialorder %v917, 8.507059e+37
          %v919 = vand.u32 %v907, 2147483648
          %v920 = vor.u32 1.1754944e-38, %v919
          %v921 = vsel %vm918, %v920, %v916
          %v922 = vmul.f32 %v897, %v921
          %v923 = vmin.f32 %v922, 1.0
          %v924 = vmax.f32 %v923, -1.0
          %v925 = vmul.f32 %v831, %v831
          %v926 = vmin.f32 16.0, %v925
          %v927 = vmul.f32 %v926, 2.1237322e-06
          %v928 = vadd.f32 %v927, 0.00028619796
          %v929 = vmul.f32 %v926, %v928
          %v930 = vadd.f32 %v929, 0.0036580483
          %v931 = vmul.f32 %v926, %v930
          %v932 = vadd.f32 %v931, 0.05243302
          %v933 = vmul.f32 %v926, %v932
          %v934 = vadd.f32 %v933, 0.18741608
          %v935 = vmul.f32 %v926, %v934
          %v936 = vadd.f32 %v935, 1.1283791
          %v937 = vmul.f32 %v831, %v936
          %v938 = vmul.f32 %v926, 3.8918573e-05
          %v939 = vadd.f32 %v938, 0.001143296
          %v940 = vmul.f32 %v926, %v939
          %v941 = vadd.f32 %v940, 0.014752088
          %v942 = vmul.f32 %v926, %v941
          %v943 = vadd.f32 %v942, 0.112945676
          %v944 = vmul.f32 %v926, %v943
          %v945 = vadd.f32 %v944, 0.4994258
          %v946 = vmul.f32 %v926, %v945
          %v947 = vadd.f32 %v946, 1.0
          %v948 = vrcp.pop %v947
          %v949 = vmul.f32 %v947, %v948
          %v950 = vsub.f32 1.0, %v949
          %v951 = vmul.f32 %v948, %v950
          %v952 = vadd.f32 %v948, %v951
          %vm953 = vweird.f32 %v947
          %vm954 = vweird.f32 %v948
          %vm955 = vmor %vm953, %vm954
          %v956 = vsel %vm955, %v948, %v952
          %v957 = vand.u32 2147483647, %v947
          %vm958 = vcmp.eq.f32.partialorder %v957, 8.507059e+37
          %v959 = vand.u32 %v947, 2147483648
          %v960 = vor.u32 1.1754944e-38, %v959
          %v961 = vsel %vm958, %v960, %v956
          %v962 = vmul.f32 %v937, %v961
          %v963 = vmin.f32 %v962, 1.0
          %v964 = vmax.f32 %v963, -1.0
          %v965 = vmul.f32 %v832, %v832
          %v966 = vmin.f32 16.0, %v965
          %v967 = vmul.f32 %v966, 2.1237322e-06
          %v968 = vadd.f32 %v967, 0.00028619796
          %v969 = vmul.f32 %v966, %v968
          %v970 = vadd.f32 %v969, 0.0036580483
          %v971 = vmul.f32 %v966, %v970
          %v972 = vadd.f32 %v971, 0.05243302
          %v973 = vmul.f32 %v966, %v972
          %v974 = vadd.f32 %v973, 0.18741608
          %v975 = vmul.f32 %v966, %v974
          %v976 = vadd.f32 %v975, 1.1283791
          %v977 = vmul.f32 %v832, %v976
          %v978 = vmul.f32 %v966, 3.8918573e-05
          %v979 = vadd.f32 %v978, 0.001143296
          %v980 = vmul.f32 %v966, %v979
          %v981 = vadd.f32 %v980, 0.014752088
          %v982 = vmul.f32 %v966, %v981
          %v983 = vadd.f32 %v982, 0.112945676
          %v984 = vmul.f32 %v966, %v983
          %v985 = vadd.f32 %v984, 0.4994258
          %v986 = vmul.f32 %v966, %v985
          %v987 = vadd.f32 %v986, 1.0
          %v988 = vrcp.pop %v987
          %v989 = vmul.f32 %v987, %v988
          %v990 = vsub.f32 1.0, %v989
          %v991 = vmul.f32 %v988, %v990
          %v992 = vadd.f32 %v988, %v991
          %vm993 = vweird.f32 %v987
          %vm994 = vweird.f32 %v988
          %vm995 = vmor %vm993, %vm994
          %v996 = vsel %vm995, %v988, %v992
          %v997 = vand.u32 2147483647, %v987
          %vm998 = vcmp.eq.f32.partialorder %v997, 8.507059e+37
          %v999 = vand.u32 %v987, 2147483648
          %v1000 = vor.u32 1.1754944e-38, %v999
          %v1001 = vsel %vm998, %v1000, %v996
          %v1002 = vmul.f32 %v977, %v1001
          %v1003 = vmin.f32 %v1002, 1.0
          %v1004 = vmax.f32 %v1003, -1.0
          %v1005 = vmul.f32 %v833, %v833
          %v1006 = vmin.f32 16.0, %v1005
          %v1007 = vmul.f32 %v1006, 2.1237322e-06
          %v1008 = vadd.f32 %v1007, 0.00028619796
          %v1009 = vmul.f32 %v1006, %v1008
          %v1010 = vadd.f32 %v1009, 0.0036580483
          %v1011 = vmul.f32 %v1006, %v1010
          %v1012 = vadd.f32 %v1011, 0.05243302
          %v1013 = vmul.f32 %v1006, %v1012
          %v1014 = vadd.f32 %v1013, 0.18741608
          %v1015 = vmul.f32 %v1006, %v1014
          %v1016 = vadd.f32 %v1015, 1.1283791
          %v1017 = vmul.f32 %v833, %v1016
          %v1018 = vmul.f32 %v1006, 3.8918573e-05
          %v1019 = vadd.f32 %v1018, 0.001143296
          %v1020 = vmul.f32 %v1006, %v1019
          %v1021 = vadd.f32 %v1020, 0.014752088
          %v1022 = vmul.f32 %v1006, %v1021
          %v1023 = vadd.f32 %v1022, 0.112945676
          %v1024 = vmul.f32 %v1006, %v1023
          %v1025 = vadd.f32 %v1024, 0.4994258
          %v1026 = vmul.f32 %v1006, %v1025
          %v1027 = vadd.f32 %v1026, 1.0
          %v1028 = vrcp.pop %v1027
          %v1029 = vmul.f32 %v1027, %v1028
          %v1030 = vsub.f32 1.0, %v1029
          %v1031 = vmul.f32 %v1028, %v1030
          %v1032 = vadd.f32 %v1028, %v1031
          %vm1033 = vweird.f32 %v1027
          %vm1034 = vweird.f32 %v1028
          %vm1035 = vmor %vm1033, %vm1034
          %v1036 = vsel %vm1035, %v1028, %v1032
          %v1037 = vand.u32 2147483647, %v1027
          %vm1038 = vcmp.eq.f32.partialorder %v1037, 8.507059e+37
          %v1039 = vand.u32 %v1027, 2147483648
          %v1040 = vor.u32 1.1754944e-38, %v1039
          %v1041 = vsel %vm1038, %v1040, %v1036
          %v1042 = vmul.f32 %v1017, %v1041
          %v1043 = vmin.f32 %v1042, 1.0
          %v1044 = vmax.f32 %v1043, -1.0
          %v1045 = vmul.f32 %v834, %v834
          %v1046 = vmin.f32 16.0, %v1045
          %v1047 = vmul.f32 %v1046, 2.1237322e-06
          %v1048 = vadd.f32 %v1047, 0.00028619796
          %v1049 = vmul.f32 %v1046, %v1048
          %v1050 = vadd.f32 %v1049, 0.0036580483
          %v1051 = vmul.f32 %v1046, %v1050
          %v1052 = vadd.f32 %v1051, 0.05243302
          %v1053 = vmul.f32 %v1046, %v1052
          %v1054 = vadd.f32 %v1053, 0.18741608
          %v1055 = vmul.f32 %v1046, %v1054
          %v1056 = vadd.f32 %v1055, 1.1283791
          %v1057 = vmul.f32 %v834, %v1056
          %v1058 = vmul.f32 %v1046, 3.8918573e-05
          %v1059 = vadd.f32 %v1058, 0.001143296
          %v1060 = vmul.f32 %v1046, %v1059
          %v1061 = vadd.f32 %v1060, 0.014752088
          %v1062 = vmul.f32 %v1046, %v1061
          %v1063 = vadd.f32 %v1062, 0.112945676
          %v1064 = vmul.f32 %v1046, %v1063
          %v1065 = vadd.f32 %v1064, 0.4994258
          %v1066 = vmul.f32 %v1046, %v1065
          %v1067 = vadd.f32 %v1066, 1.0
          %v1068 = vrcp.pop %v1067
          %v1069 = vmul.f32 %v1067, %v1068
          %v1070 = vsub.f32 1.0, %v1069
          %v1071 = vmul.f32 %v1068, %v1070
          %v1072 = vadd.f32 %v1068, %v1071
          %vm1073 = vweird.f32 %v1067
          %vm1074 = vweird.f32 %v1068
          %vm1075 = vmor %vm1073, %vm1074
          %v1076 = vsel %vm1075, %v1068, %v1072
          %v1077 = vand.u32 2147483647, %v1067
          %vm1078 = vcmp.eq.f32.partialorder %v1077, 8.507059e+37
          %v1079 = vand.u32 %v1067, 2147483648
          %v1080 = vor.u32 1.1754944e-38, %v1079
          %v1081 = vsel %vm1078, %v1080, %v1076
          %v1082 = vmul.f32 %v1057, %v1081
          %v1083 = vmin.f32 %v1082, 1.0
          %v1084 = vmax.f32 %v1083, -1.0
          %v1085 = vmul.f32 %v835, %v835
          %v1086 = vmin.f32 16.0, %v1085
          %v1087 = vmul.f32 %v1086, 2.1237322e-06
          %v1088 = vadd.f32 %v1087, 0.00028619796
          %v1089 = vmul.f32 %v1086, %v1088
          %v1090 = vadd.f32 %v1089, 0.0036580483
          %v1091 = vmul.f32 %v1086, %v1090
          %v1092 = vadd.f32 %v1091, 0.05243302
          %v1093 = vmul.f32 %v1086, %v1092
          %v1094 = vadd.f32 %v1093, 0.18741608
          %v1095 = vmul.f32 %v1086, %v1094
          %v1096 = vadd.f32 %v1095, 1.1283791
          %v1097 = vmul.f32 %v835, %v1096
          %v1098 = vmul.f32 %v1086, 3.8918573e-05
          %v1099 = vadd.f32 %v1098, 0.001143296
          %v1100 = vmul.f32 %v1086, %v1099
          %v1101 = vadd.f32 %v1100, 0.014752088
          %v1102 = vmul.f32 %v1086, %v1101
          %v1103 = vadd.f32 %v1102, 0.112945676
          %v1104 = vmul.f32 %v1086, %v1103
          %v1105 = vadd.f32 %v1104, 0.4994258
          %v1106 = vmul.f32 %v1086, %v1105
          %v1107 = vadd.f32 %v1106, 1.0
          %v1108 = vrcp.pop %v1107
          %v1109 = vmul.f32 %v1107, %v1108
          %v1110 = vsub.f32 1.0, %v1109
          %v1111 = vmul.f32 %v1108, %v1110
          %v1112 = vadd.f32 %v1108, %v1111
          %vm1113 = vweird.f32 %v1107
          %vm1114 = vweird.f32 %v1108
          %vm1115 = vmor %vm1113, %vm1114
          %v1116 = vsel %vm1115, %v1108, %v1112
          %v1117 = vand.u32 2147483647, %v1107
          %vm1118 = vcmp.eq.f32.partialorder %v1117, 8.507059e+37
          %v1119 = vand.u32 %v1107, 2147483648
          %v1120 = vor.u32 1.1754944e-38, %v1119
          %v1121 = vsel %vm1118, %v1120, %v1116
          %v1122 = vmul.f32 %v1097, %v1121
          %v1123 = vmin.f32 %v1122, 1.0
          %v1124 = vmax.f32 %v1123, -1.0
          %v1125 = vmul.f32 %v836, %v836
          %v1126 = vmin.f32 16.0, %v1125
          %v1127 = vmul.f32 %v1126, 2.1237322e-06
          %v1128 = vadd.f32 %v1127, 0.00028619796
          %v1129 = vmul.f32 %v1126, %v1128
          %v1130 = vadd.f32 %v1129, 0.0036580483
          %v1131 = vmul.f32 %v1126, %v1130
          %v1132 = vadd.f32 %v1131, 0.05243302
          %v1133 = vmul.f32 %v1126, %v1132
          %v1134 = vadd.f32 %v1133, 0.18741608
          %v1135 = vmul.f32 %v1126, %v1134
          %v1136 = vadd.f32 %v1135, 1.1283791
          %v1137 = vmul.f32 %v836, %v1136
          %v1138 = vmul.f32 %v1126, 3.8918573e-05
          %v1139 = vadd.f32 %v1138, 0.001143296
          %v1140 = vmul.f32 %v1126, %v1139
          %v1141 = vadd.f32 %v1140, 0.014752088
          %v1142 = vmul.f32 %v1126, %v1141
          %v1143 = vadd.f32 %v1142, 0.112945676
          %v1144 = vmul.f32 %v1126, %v1143
          %v1145 = vadd.f32 %v1144, 0.4994258
          %v1146 = vmul.f32 %v1126, %v1145
          %v1147 = vadd.f32 %v1146, 1.0
          %v1148 = vrcp.pop %v1147
          %v1149 = vmul.f32 %v1147, %v1148
          %v1150 = vsub.f32 1.0, %v1149
          %v1151 = vmul.f32 %v1148, %v1150
          %v1152 = vadd.f32 %v1148, %v1151
          %vm1153 = vweird.f32 %v1147
          %vm1154 = vweird.f32 %v1148
          %vm1155 = vmor %vm1153, %vm1154
          %v1156 = vsel %vm1155, %v1148, %v1152
          %v1157 = vand.u32 2147483647, %v1147
          %vm1158 = vcmp.eq.f32.partialorder %v1157, 8.507059e+37
          %v1159 = vand.u32 %v1147, 2147483648
          %v1160 = vor.u32 1.1754944e-38, %v1159
          %v1161 = vsel %vm1158, %v1160, %v1156
          %v1162 = vmul.f32 %v1137, %v1161
          %v1163 = vmin.f32 %v1162, 1.0
          %v1164 = vmax.f32 %v1163, -1.0
          %v1165 = vmul.f32 %v837, %v837
          %v1166 = vmin.f32 16.0, %v1165
          %v1167 = vmul.f32 %v1166, 2.1237322e-06
          %v1168 = vadd.f32 %v1167, 0.00028619796
          %v1169 = vmul.f32 %v1166, %v1168
          %v1170 = vadd.f32 %v1169, 0.0036580483
          %v1171 = vmul.f32 %v1166, %v1170
          %v1172 = vadd.f32 %v1171, 0.05243302
          %v1173 = vmul.f32 %v1166, %v1172
          %v1174 = vadd.f32 %v1173, 0.18741608
          %v1175 = vmul.f32 %v1166, %v1174
          %v1176 = vadd.f32 %v1175, 1.1283791
          %v1177 = vmul.f32 %v837, %v1176
          %v1178 = vmul.f32 %v1166, 3.8918573e-05
          %v1179 = vadd.f32 %v1178, 0.001143296
          %v1180 = vmul.f32 %v1166, %v1179
          %v1181 = vadd.f32 %v1180, 0.014752088
          %v1182 = vmul.f32 %v1166, %v1181
          %v1183 = vadd.f32 %v1182, 0.112945676
          %v1184 = vmul.f32 %v1166, %v1183
          %v1185 = vadd.f32 %v1184, 0.4994258
          %v1186 = vmul.f32 %v1166, %v1185
          %v1187 = vadd.f32 %v1186, 1.0
          %v1188 = vrcp.pop %v1187
          %v1189 = vmul.f32 %v1187, %v1188
          %v1190 = vsub.f32 1.0, %v1189
          %v1191 = vmul.f32 %v1188, %v1190
          %v1192 = vadd.f32 %v1188, %v1191
          %vm1193 = vweird.f32 %v1187
          %vm1194 = vweird.f32 %v1188
          %vm1195 = vmor %vm1193, %vm1194
          %v1196 = vsel %vm1195, %v1188, %v1192
          %v1197 = vand.u32 2147483647, %v1187
          %vm1198 = vcmp.eq.f32.partialorder %v1197, 8.507059e+37
          %v1199 = vand.u32 %v1187, 2147483648
          %v1200 = vor.u32 1.1754944e-38, %v1199
          %v1201 = vsel %vm1198, %v1200, %v1196
          %v1202 = vmul.f32 %v1177, %v1201
          %v1203 = vmin.f32 %v1202, 1.0
          %v1204 = vmax.f32 %v1203, -1.0
          %v1205 = vmul.f32 %v838, %v838
          %v1206 = vmin.f32 16.0, %v1205
          %v1207 = vmul.f32 %v1206, 2.1237322e-06
          %v1208 = vadd.f32 %v1207, 0.00028619796
          %v1209 = vmul.f32 %v1206, %v1208
          %v1210 = vadd.f32 %v1209, 0.0036580483
          %v1211 = vmul.f32 %v1206, %v1210
          %v1212 = vadd.f32 %v1211, 0.05243302
          %v1213 = vmul.f32 %v1206, %v1212
          %v1214 = vadd.f32 %v1213, 0.18741608
          %v1215 = vmul.f32 %v1206, %v1214
          %v1216 = vadd.f32 %v1215, 1.1283791
          %v1217 = vmul.f32 %v838, %v1216
          %v1218 = vmul.f32 %v1206, 3.8918573e-05
          %v1219 = vadd.f32 %v1218, 0.001143296
          %v1220 = vmul.f32 %v1206, %v1219
          %v1221 = vadd.f32 %v1220, 0.014752088
          %v1222 = vmul.f32 %v1206, %v1221
          %v1223 = vadd.f32 %v1222, 0.112945676
          %v1224 = vmul.f32 %v1206, %v1223
          %v1225 = vadd.f32 %v1224, 0.4994258
          %v1226 = vmul.f32 %v1206, %v1225
          %v1227 = vadd.f32 %v1226, 1.0
          %v1228 = vrcp.pop %v1227
          %v1229 = vmul.f32 %v1227, %v1228
          %v1230 = vsub.f32 1.0, %v1229
          %v1231 = vmul.f32 %v1228, %v1230
          %v1232 = vadd.f32 %v1228, %v1231
          %vm1233 = vweird.f32 %v1227
          %vm1234 = vweird.f32 %v1228
          %vm1235 = vmor %vm1233, %vm1234
          %v1236 = vsel %vm1235, %v1228, %v1232
          %v1237 = vand.u32 2147483647, %v1227
          %vm1238 = vcmp.eq.f32.partialorder %v1237, 8.507059e+37
          %v1239 = vand.u32 %v1227, 2147483648
          %v1240 = vor.u32 1.1754944e-38, %v1239
          %v1241 = vsel %vm1238, %v1240, %v1236
          %v1242 = vmul.f32 %v1217, %v1241
          %v1243 = vmin.f32 %v1242, 1.0
          %v1244 = vmax.f32 %v1243, -1.0
          %v1245 = vmul.f32 %v839, %v839
          %v1246 = vmin.f32 16.0, %v1245
          %v1247 = vmul.f32 %v1246, 2.1237322e-06
          %v1248 = vadd.f32 %v1247, 0.00028619796
          %v1249 = vmul.f32 %v1246, %v1248
          %v1250 = vadd.f32 %v1249, 0.0036580483
          %v1251 = vmul.f32 %v1246, %v1250
          %v1252 = vadd.f32 %v1251, 0.05243302
          %v1253 = vmul.f32 %v1246, %v1252
          %v1254 = vadd.f32 %v1253, 0.18741608
          %v1255 = vmul.f32 %v1246, %v1254
          %v1256 = vadd.f32 %v1255, 1.1283791
          %v1257 = vmul.f32 %v839, %v1256
          %v1258 = vmul.f32 %v1246, 3.8918573e-05
          %v1259 = vadd.f32 %v1258, 0.001143296
          %v1260 = vmul.f32 %v1246, %v1259
          %v1261 = vadd.f32 %v1260, 0.014752088
          %v1262 = vmul.f32 %v1246, %v1261
          %v1263 = vadd.f32 %v1262, 0.112945676
          %v1264 = vmul.f32 %v1246, %v1263
          %v1265 = vadd.f32 %v1264, 0.4994258
          %v1266 = vmul.f32 %v1246, %v1265
          %v1267 = vadd.f32 %v1266, 1.0
          %v1268 = vrcp.pop %v1267
          %v1269 = vmul.f32 %v1267, %v1268
          %v1270 = vsub.f32 1.0, %v1269
          %v1271 = vmul.f32 %v1268, %v1270
          %v1272 = vadd.f32 %v1268, %v1271
          %vm1273 = vweird.f32 %v1267
          %vm1274 = vweird.f32 %v1268
          %vm1275 = vmor %vm1273, %vm1274
          %v1276 = vsel %vm1275, %v1268, %v1272
          %v1277 = vand.u32 2147483647, %v1267
          %vm1278 = vcmp.eq.f32.partialorder %v1277, 8.507059e+37
          %v1279 = vand.u32 %v1267, 2147483648
          %v1280 = vor.u32 1.1754944e-38, %v1279
          %v1281 = vsel %vm1278, %v1280, %v1276
          %v1282 = vmul.f32 %v1257, %v1281
          %v1283 = vmin.f32 %v1282, 1.0
          %v1284 = vmax.f32 %v1283, -1.0
          %v1285 = vmul.f32 %v840, %v840
          %v1286 = vmin.f32 16.0, %v1285
          %v1287 = vmul.f32 %v1286, 2.1237322e-06
          %v1288 = vadd.f32 %v1287, 0.00028619796
          %v1289 = vmul.f32 %v1286, %v1288
          %v1290 = vadd.f32 %v1289, 0.0036580483
          %v1291 = vmul.f32 %v1286, %v1290
          %v1292 = vadd.f32 %v1291, 0.05243302
          %v1293 = vmul.f32 %v1286, %v1292
          %v1294 = vadd.f32 %v1293, 0.18741608
          %v1295 = vmul.f32 %v1286, %v1294
          %v1296 = vadd.f32 %v1295, 1.1283791
          %v1297 = vmul.f32 %v840, %v1296
          %v1298 = vmul.f32 %v1286, 3.8918573e-05
          %v1299 = vadd.f32 %v1298, 0.001143296
          %v1300 = vmul.f32 %v1286, %v1299
          %v1301 = vadd.f32 %v1300, 0.014752088
          %v1302 = vmul.f32 %v1286, %v1301
          %v1303 = vadd.f32 %v1302, 0.112945676
          %v1304 = vmul.f32 %v1286, %v1303
          %v1305 = vadd.f32 %v1304, 0.4994258
          %v1306 = vmul.f32 %v1286, %v1305
          %v1307 = vadd.f32 %v1306, 1.0
          %v1308 = vrcp.pop %v1307
          %v1309 = vmul.f32 %v1307, %v1308
          %v1310 = vsub.f32 1.0, %v1309
          %v1311 = vmul.f32 %v1308, %v1310
          %v1312 = vadd.f32 %v1308, %v1311
          %vm1313 = vweird.f32 %v1307
          %vm1314 = vweird.f32 %v1308
          %vm1315 = vmor %vm1313, %vm1314
          %v1316 = vsel %vm1315, %v1308, %v1312
          %v1317 = vand.u32 2147483647, %v1307
          %vm1318 = vcmp.eq.f32.partialorder %v1317, 8.507059e+37
          %v1319 = vand.u32 %v1307, 2147483648
          %v1320 = vor.u32 1.1754944e-38, %v1319
          %v1321 = vsel %vm1318, %v1320, %v1316
          %v1322 = vmul.f32 %v1297, %v1321
          %v1323 = vmin.f32 %v1322, 1.0
          %v1324 = vmax.f32 %v1323, -1.0
          %v1325 = vmul.f32 %v841, %v841
          %v1326 = vmin.f32 16.0, %v1325
          %v1327 = vmul.f32 %v1326, 2.1237322e-06
          %v1328 = vadd.f32 %v1327, 0.00028619796
          %v1329 = vmul.f32 %v1326, %v1328
          %v1330 = vadd.f32 %v1329, 0.0036580483
          %v1331 = vmul.f32 %v1326, %v1330
          %v1332 = vadd.f32 %v1331, 0.05243302
          %v1333 = vmul.f32 %v1326, %v1332
          %v1334 = vadd.f32 %v1333, 0.18741608
          %v1335 = vmul.f32 %v1326, %v1334
          %v1336 = vadd.f32 %v1335, 1.1283791
          %v1337 = vmul.f32 %v841, %v1336
          %v1338 = vmul.f32 %v1326, 3.8918573e-05
          %v1339 = vadd.f32 %v1338, 0.001143296
          %v1340 = vmul.f32 %v1326, %v1339
          %v1341 = vadd.f32 %v1340, 0.014752088
          %v1342 = vmul.f32 %v1326, %v1341
          %v1343 = vadd.f32 %v1342, 0.112945676
          %v1344 = vmul.f32 %v1326, %v1343
          %v1345 = vadd.f32 %v1344, 0.4994258
          %v1346 = vmul.f32 %v1326, %v1345
          %v1347 = vadd.f32 %v1346, 1.0
          %v1348 = vrcp.pop %v1347
          %v1349 = vmul.f32 %v1347, %v1348
          %v1350 = vsub.f32 1.0, %v1349
          %v1351 = vmul.f32 %v1348, %v1350
          %v1352 = vadd.f32 %v1348, %v1351
          %vm1353 = vweird.f32 %v1347
          %vm1354 = vweird.f32 %v1348
          %vm1355 = vmor %vm1353, %vm1354
          %v1356 = vsel %vm1355, %v1348, %v1352
          %v1357 = vand.u32 2147483647, %v1347
          %vm1358 = vcmp.eq.f32.partialorder %v1357, 8.507059e+37
          %v1359 = vand.u32 %v1347, 2147483648
          %v1360 = vor.u32 1.1754944e-38, %v1359
          %v1361 = vsel %vm1358, %v1360, %v1356
          %v1362 = vmul.f32 %v1337, %v1361
          %v1363 = vmin.f32 %v1362, 1.0
          %v1364 = vmax.f32 %v1363, -1.0
          %v1365 = vmul.f32 %v842, %v842
          %v1366 = vmin.f32 16.0, %v1365
          %v1367 = vmul.f32 %v1366, 2.1237322e-06
          %v1368 = vadd.f32 %v1367, 0.00028619796
          %v1369 = vmul.f32 %v1366, %v1368
          %v1370 = vadd.f32 %v1369, 0.0036580483
          %v1371 = vmul.f32 %v1366, %v1370
          %v1372 = vadd.f32 %v1371, 0.05243302
          %v1373 = vmul.f32 %v1366, %v1372
          %v1374 = vadd.f32 %v1373, 0.18741608
          %v1375 = vmul.f32 %v1366, %v1374
          %v1376 = vadd.f32 %v1375, 1.1283791
          %v1377 = vmul.f32 %v842, %v1376
          %v1378 = vmul.f32 %v1366, 3.8918573e-05
          %v1379 = vadd.f32 %v1378, 0.001143296
          %v1380 = vmul.f32 %v1366, %v1379
          %v1381 = vadd.f32 %v1380, 0.014752088
          %v1382 = vmul.f32 %v1366, %v1381
          %v1383 = vadd.f32 %v1382, 0.112945676
          %v1384 = vmul.f32 %v1366, %v1383
          %v1385 = vadd.f32 %v1384, 0.4994258
          %v1386 = vmul.f32 %v1366, %v1385
          %v1387 = vadd.f32 %v1386, 1.0
          %v1388 = vrcp.pop %v1387
          %v1389 = vmul.f32 %v1387, %v1388
          %v1390 = vsub.f32 1.0, %v1389
          %v1391 = vmul.f32 %v1388, %v1390
          %v1392 = vadd.f32 %v1388, %v1391
          %vm1393 = vweird.f32 %v1387
          %vm1394 = vweird.f32 %v1388
          %vm1395 = vmor %vm1393, %vm1394
          %v1396 = vsel %vm1395, %v1388, %v1392
          %v1397 = vand.u32 2147483647, %v1387
          %vm1398 = vcmp.eq.f32.partialorder %v1397, 8.507059e+37
          %v1399 = vand.u32 %v1387, 2147483648
          %v1400 = vor.u32 1.1754944e-38, %v1399
          %v1401 = vsel %vm1398, %v1400, %v1396
          %v1402 = vmul.f32 %v1377, %v1401
          %v1403 = vmin.f32 %v1402, 1.0
          %v1404 = vmax.f32 %v1403, -1.0
          %v1405 = vmul.f32 %v843, %v843
          %v1406 = vmin.f32 16.0, %v1405
          %v1407 = vmul.f32 %v1406, 2.1237322e-06
          %v1408 = vadd.f32 %v1407, 0.00028619796
          %v1409 = vmul.f32 %v1406, %v1408
          %v1410 = vadd.f32 %v1409, 0.0036580483
          %v1411 = vmul.f32 %v1406, %v1410
          %v1412 = vadd.f32 %v1411, 0.05243302
          %v1413 = vmul.f32 %v1406, %v1412
          %v1414 = vadd.f32 %v1413, 0.18741608
          %v1415 = vmul.f32 %v1406, %v1414
          %v1416 = vadd.f32 %v1415, 1.1283791
          %v1417 = vmul.f32 %v843, %v1416
          %v1418 = vmul.f32 %v1406, 3.8918573e-05
          %v1419 = vadd.f32 %v1418, 0.001143296
          %v1420 = vmul.f32 %v1406, %v1419
          %v1421 = vadd.f32 %v1420, 0.014752088
          %v1422 = vmul.f32 %v1406, %v1421
          %v1423 = vadd.f32 %v1422, 0.112945676
          %v1424 = vmul.f32 %v1406, %v1423
          %v1425 = vadd.f32 %v1424, 0.4994258
          %v1426 = vmul.f32 %v1406, %v1425
          %v1427 = vadd.f32 %v1426, 1.0
          %v1428 = vrcp.pop %v1427
          %v1429 = vmul.f32 %v1427, %v1428
          %v1430 = vsub.f32 1.0, %v1429
          %v1431 = vmul.f32 %v1428, %v1430
          %v1432 = vadd.f32 %v1428, %v1431
          %vm1433 = vweird.f32 %v1427
          %vm1434 = vweird.f32 %v1428
          %vm1435 = vmor %vm1433, %vm1434
          %v1436 = vsel %vm1435, %v1428, %v1432
          %v1437 = vand.u32 2147483647, %v1427
          %vm1438 = vcmp.eq.f32.partialorder %v1437, 8.507059e+37
          %v1439 = vand.u32 %v1427, 2147483648
          %v1440 = vor.u32 1.1754944e-38, %v1439
          %v1441 = vsel %vm1438, %v1440, %v1436
          %v1442 = vmul.f32 %v1417, %v1441
          %v1443 = vmin.f32 %v1442, 1.0
          %v1444 = vmax.f32 %v1443, -1.0
          %v1445 = vmul.f32 %v844, %v844
          %v1446 = vmin.f32 16.0, %v1445
          %v1447 = vmul.f32 %v1446, 2.1237322e-06
          %v1448 = vadd.f32 %v1447, 0.00028619796
          %v1449 = vmul.f32 %v1446, %v1448
          %v1450 = vadd.f32 %v1449, 0.0036580483
          %v1451 = vmul.f32 %v1446, %v1450
          %v1452 = vadd.f32 %v1451, 0.05243302
          %v1453 = vmul.f32 %v1446, %v1452
          %v1454 = vadd.f32 %v1453, 0.18741608
          %v1455 = vmul.f32 %v1446, %v1454
          %v1456 = vadd.f32 %v1455, 1.1283791
          %v1457 = vmul.f32 %v844, %v1456
          %v1458 = vmul.f32 %v1446, 3.8918573e-05
          %v1459 = vadd.f32 %v1458, 0.001143296
          %v1460 = vmul.f32 %v1446, %v1459
          %v1461 = vadd.f32 %v1460, 0.014752088
          %v1462 = vmul.f32 %v1446, %v1461
          %v1463 = vadd.f32 %v1462, 0.112945676
          %v1464 = vmul.f32 %v1446, %v1463
          %v1465 = vadd.f32 %v1464, 0.4994258
          %v1466 = vmul.f32 %v1446, %v1465
          %v1467 = vadd.f32 %v1466, 1.0
          %v1468 = vrcp.pop %v1467
          %v1469 = vmul.f32 %v1467, %v1468
          %v1470 = vsub.f32 1.0, %v1469
          %v1471 = vmul.f32 %v1468, %v1470
          %v1472 = vadd.f32 %v1468, %v1471
          %vm1473 = vweird.f32 %v1467
          %vm1474 = vweird.f32 %v1468
          %vm1475 = vmor %vm1473, %vm1474
          %v1476 = vsel %vm1475, %v1468, %v1472
          %v1477 = vand.u32 2147483647, %v1467
          %vm1478 = vcmp.eq.f32.partialorder %v1477, 8.507059e+37
          %v1479 = vand.u32 %v1467, 2147483648
          %v1480 = vor.u32 1.1754944e-38, %v1479
          %v1481 = vsel %vm1478, %v1480, %v1476
          %v1482 = vmul.f32 %v1457, %v1481
          %v1483 = vmin.f32 %v1482, 1.0
          %v1484 = vmax.f32 %v1483, -1.0
          %v1485 = vadd.f32 %v884, 1.0
          %v1486 = vadd.f32 %v924, 1.0
          %v1487 = vadd.f32 %v964, 1.0
          %v1488 = vadd.f32 %v1004, 1.0
          %v1489 = vadd.f32 %v1044, 1.0
          %v1490 = vadd.f32 %v1084, 1.0
          %v1491 = vadd.f32 %v1124, 1.0
          %v1492 = vadd.f32 %v1164, 1.0
          %v1493 = vadd.f32 %v1204, 1.0
          %v1494 = vadd.f32 %v1244, 1.0
          %v1495 = vadd.f32 %v1284, 1.0
          %v1496 = vadd.f32 %v1324, 1.0
          %v1497 = vadd.f32 %v1364, 1.0
          %v1498 = vadd.f32 %v1404, 1.0
          %v1499 = vadd.f32 %v1444, 1.0
          %v1500 = vadd.f32 %v1484, 1.0
          %v1501 = vmul.f32 %v806, %v1485
          %v1502 = vmul.f32 %v807, %v1486
          %v1503 = vmul.f32 %v808, %v1487
          %v1504 = vmul.f32 %v809, %v1488
          %v1505 = vmul.f32 %v810, %v1489
          %v1506 = vmul.f32 %v811, %v1490
          %v1507 = vmul.f32 %v812, %v1491
          %v1508 = vmul.f32 %v813, %v1492
          %v1509 = vmul.f32 %v814, %v1493
          %v1510 = vmul.f32 %v815, %v1494
          %v1511 = vmul.f32 %v816, %v1495
          %v1512 = vmul.f32 %v817, %v1496
          %v1513 = vmul.f32 %v818, %v1497
          %v1514 = vmul.f32 %v819, %v1498
          %v1515 = vmul.f32 %v820, %v1499
          %v1516 = vmul.f32 %v821, %v1500
          %v1517 = vadd.f32 %v1501, %v1502
          %1518 = vadd.xlane.f32.xlu0 %v1517
          %v1519 = vpop.xlane.xlu0 %1518
          %v1520 = vadd.f32 %v1503, %v1504
          %1521 = vadd.xlane.f32.xlu0 %v1520
          %v1522 = vpop.xlane.xlu0 %1521
          %v1523 = vadd.f32 %v1505, %v1506
          %1524 = vadd.xlane.f32.xlu0 %v1523
          %v1525 = vpop.xlane.xlu0 %1524
          %v1526 = vadd.f32 %v1507, %v1508
          %1527 = vadd.xlane.f32.xlu0 %v1526
          %v1528 = vpop.xlane.xlu0 %1527
          %v1529 = vadd.f32 %v1509, %v1510
          %1530 = vadd.xlane.f32.xlu0 %v1529
          %v1531 = vpop.xlane.xlu0 %1530
          %v1532 = vadd.f32 %v1511, %v1512
          %1533 = vadd.xlane.f32.xlu0 %v1532
          %v1534 = vpop.xlane.xlu0 %1533
          %v1535 = vadd.f32 %v1513, %v1514
          %1536 = vadd.xlane.f32.xlu0 %v1535
          %v1537 = vpop.xlane.xlu0 %1536
          %v1538 = vadd.f32 %v1515, %v1516
          %1539 = vadd.xlane.f32.xlu0 %v1538
          %v1540 = vpop.xlane.xlu0 %1539
          %v1541 = vrcp.pop 256.0
          %v1542 = vmul.f32 256.0, %v1541
          %v1543 = vsub.f32 1.0, %v1542
          %v1544 = vmul.f32 %v1541, %v1543
          %v1545 = vadd.f32 %v1541, %v1544
          %vm1546 = vweird.f32 %v1541
          %v1547 = vsel %vm1546, %v1541, %v1545
          %v1548 = vmul.f32 %v1519, %v1547
          %v1549 = vmul.f32 %v1522, %v1547
          %v1550 = vmul.f32 %v1525, %v1547
          %v1551 = vmul.f32 %v1528, %v1547
          %v1552 = vmul.f32 %v1531, %v1547
          %v1553 = vmul.f32 %v1534, %v1547
          %v1554 = vmul.f32 %v1537, %v1547
          %v1555 = vmul.f32 %v1540, %v1547
          %v1556 = vsub.f32 %v1501, %v1548
          %v1557 = vsub.f32 %v1502, %v1548
          %v1558 = vsub.f32 %v1503, %v1549
          %v1559 = vsub.f32 %v1504, %v1549
          %v1560 = vsub.f32 %v1505, %v1550
          %v1561 = vsub.f32 %v1506, %v1550
          %v1562 = vsub.f32 %v1507, %v1551
          %v1563 = vsub.f32 %v1508, %v1551
          %v1564 = vsub.f32 %v1509, %v1552
          %v1565 = vsub.f32 %v1510, %v1552
          %v1566 = vsub.f32 %v1511, %v1553
          %v1567 = vsub.f32 %v1512, %v1553
          %v1568 = vsub.f32 %v1513, %v1554
          %v1569 = vsub.f32 %v1514, %v1554
          %v1570 = vsub.f32 %v1515, %v1555
          %v1571 = vsub.f32 %v1516, %v1555
          %v1572 = vmul.f32 %v1556, %v1556
          %v1573 = vmul.f32 %v1557, %v1557
          %v1574 = vmul.f32 %v1558, %v1558
          %v1575 = vmul.f32 %v1559, %v1559
          %v1576 = vmul.f32 %v1560, %v1560
          %v1577 = vmul.f32 %v1561, %v1561
          %v1578 = vmul.f32 %v1562, %v1562
          %v1579 = vmul.f32 %v1563, %v1563
          %v1580 = vmul.f32 %v1564, %v1564
          %v1581 = vmul.f32 %v1565, %v1565
          %v1582 = vmul.f32 %v1566, %v1566
          %v1583 = vmul.f32 %v1567, %v1567
          %v1584 = vmul.f32 %v1568, %v1568
          %v1585 = vmul.f32 %v1569, %v1569
          %v1586 = vmul.f32 %v1570, %v1570
          %v1587 = vmul.f32 %v1571, %v1571
          %v1588 = vadd.f32 %v1572, %v1573
          %1589 = vadd.xlane.f32.xlu0 %v1588
          %v1590 = vpop.xlane.xlu0 %1589
          %v1591 = vadd.f32 %v1574, %v1575
          %1592 = vadd.xlane.f32.xlu0 %v1591
          %v1593 = vpop.xlane.xlu0 %1592
          %v1594 = vadd.f32 %v1576, %v1577
          %1595 = vadd.xlane.f32.xlu0 %v1594
          %v1596 = vpop.xlane.xlu0 %1595
          %v1597 = vadd.f32 %v1578, %v1579
          %1598 = vadd.xlane.f32.xlu0 %v1597
          %v1599 = vpop.xlane.xlu0 %1598
          %v1600 = vadd.f32 %v1580, %v1581
          %1601 = vadd.xlane.f32.xlu0 %v1600
          %v1602 = vpop.xlane.xlu0 %1601
          %v1603 = vadd.f32 %v1582, %v1583
          %1604 = vadd.xlane.f32.xlu0 %v1603
          %v1605 = vpop.xlane.xlu0 %1604
          %v1606 = vadd.f32 %v1584, %v1585
          %1607 = vadd.xlane.f32.xlu0 %v1606
          %v1608 = vpop.xlane.xlu0 %1607
          %v1609 = vadd.f32 %v1586, %v1587
          %1610 = vadd.xlane.f32.xlu0 %v1609
          %v1611 = vpop.xlane.xlu0 %1610
          %v1612 = vmul.f32 %v1590, %v1547
          %v1613 = vmul.f32 %v1593, %v1547
          %v1614 = vmul.f32 %v1596, %v1547
          %v1615 = vmul.f32 %v1599, %v1547
          %v1616 = vmul.f32 %v1602, %v1547
          %v1617 = vmul.f32 %v1605, %v1547
          %v1618 = vmul.f32 %v1608, %v1547
          %v1619 = vmul.f32 %v1611, %v1547
          %v1620 = vadd.f32 %v1612, 1e-07
          %v1621 = vadd.f32 %v1613, 1e-07
          %v1622 = vadd.f32 %v1614, 1e-07
          %v1623 = vadd.f32 %v1615, 1e-07
          %v1624 = vadd.f32 %v1616, 1e-07
          %v1625 = vadd.f32 %v1617, 1e-07
          %v1626 = vadd.f32 %v1618, 1e-07
          %v1627 = vadd.f32 %v1619, 1e-07
          %v1628 = vrsqrt.pop %v1620
          %v1629 = vmul.f32 %v1628, %v1620
          %v1630 = vmul.f32 %v1629, %v1628
          %v1631 = vmul.f32 0.5, %v1630
          %v1632 = vsub.f32 1.5, %v1631
          %v1633 = vmul.f32 %v1628, %v1632
          %vm1634 = vweird.f32 %v1620
          %vm1635 = vweird.f32 %v1628
          %vm1636 = vmor %vm1634, %vm1635
          %v1637 = vsel %vm1636, %v1628, %v1633
          %v1638 = vrsqrt.pop %v1621
          %v1639 = vmul.f32 %v1638, %v1621
          %v1640 = vmul.f32 %v1639, %v1638
          %v1641 = vmul.f32 0.5, %v1640
          %v1642 = vsub.f32 1.5, %v1641
          %v1643 = vmul.f32 %v1638, %v1642
          %vm1644 = vweird.f32 %v1621
          %vm1645 = vweird.f32 %v1638
          %vm1646 = vmor %vm1644, %vm1645
          %v1647 = vsel %vm1646, %v1638, %v1643
          %v1648 = vrsqrt.pop %v1622
          %v1649 = vmul.f32 %v1648, %v1622
          %v1650 = vmul.f32 %v1649, %v1648
          %v1651 = vmul.f32 0.5, %v1650
          %v1652 = vsub.f32 1.5, %v1651
          %v1653 = vmul.f32 %v1648, %v1652
          %vm1654 = vweird.f32 %v1622
          %vm1655 = vweird.f32 %v1648
          %vm1656 = vmor %vm1654, %vm1655
          %v1657 = vsel %vm1656, %v1648, %v1653
          %v1658 = vrsqrt.pop %v1623
          %v1659 = vmul.f32 %v1658, %v1623
          %v1660 = vmul.f32 %v1659, %v1658
          %v1661 = vmul.f32 0.5, %v1660
          %v1662 = vsub.f32 1.5, %v1661
          %v1663 = vmul.f32 %v1658, %v1662
          %vm1664 = vweird.f32 %v1623
          %vm1665 = vweird.f32 %v1658
          %vm1666 = vmor %vm1664, %vm1665
          %v1667 = vsel %vm1666, %v1658, %v1663
          %v1668 = vrsqrt.pop %v1624
          %v1669 = vmul.f32 %v1668, %v1624
          %v1670 = vmul.f32 %v1669, %v1668
          %v1671 = vmul.f32 0.5, %v1670
          %v1672 = vsub.f32 1.5, %v1671
          %v1673 = vmul.f32 %v1668, %v1672
          %vm1674 = vweird.f32 %v1624
          %vm1675 = vweird.f32 %v1668
          %vm1676 = vmor %vm1674, %vm1675
          %v1677 = vsel %vm1676, %v1668, %v1673
          %v1678 = vrsqrt.pop %v1625
          %v1679 = vmul.f32 %v1678, %v1625
          %v1680 = vmul.f32 %v1679, %v1678
          %v1681 = vmul.f32 0.5, %v1680
          %v1682 = vsub.f32 1.5, %v1681
          %v1683 = vmul.f32 %v1678, %v1682
          %vm1684 = vweird.f32 %v1625
          %vm1685 = vweird.f32 %v1678
          %vm1686 = vmor %vm1684, %vm1685
          %v1687 = vsel %vm1686, %v1678, %v1683
          %v1688 = vrsqrt.pop %v1626
          %v1689 = vmul.f32 %v1688, %v1626
          %v1690 = vmul.f32 %v1689, %v1688
          %v1691 = vmul.f32 0.5, %v1690
          %v1692 = vsub.f32 1.5, %v1691
          %v1693 = vmul.f32 %v1688, %v1692
          %vm1694 = vweird.f32 %v1626
          %vm1695 = vweird.f32 %v1688
          %vm1696 = vmor %vm1694, %vm1695
          %v1697 = vsel %vm1696, %v1688, %v1693
          %v1698 = vrsqrt.pop %v1627
          %v1699 = vmul.f32 %v1698, %v1627
          %v1700 = vmul.f32 %v1699, %v1698
          %v1701 = vmul.f32 0.5, %v1700
          %v1702 = vsub.f32 1.5, %v1701
          %v1703 = vmul.f32 %v1698, %v1702
          %vm1704 = vweird.f32 %v1627
          %vm1705 = vweird.f32 %v1698
          %vm1706 = vmor %vm1704, %vm1705
          %v1707 = vsel %vm1706, %v1698, %v1703
          %v1708 = vmul.f32 %v1556, %v1637
          %v1709 = vmul.f32 %v1557, %v1637
          %v1710 = vmul.f32 %v1558, %v1647
          %v1711 = vmul.f32 %v1559, %v1647
          %v1712 = vmul.f32 %v1560, %v1657
          %v1713 = vmul.f32 %v1561, %v1657
          %v1714 = vmul.f32 %v1562, %v1667
          %v1715 = vmul.f32 %v1563, %v1667
          %v1716 = vmul.f32 %v1564, %v1677
          %v1717 = vmul.f32 %v1565, %v1677
          %v1718 = vmul.f32 %v1566, %v1687
          %v1719 = vmul.f32 %v1567, %v1687
          %v1720 = vmul.f32 %v1568, %v1697
          %v1721 = vmul.f32 %v1569, %v1697
          %v1722 = vmul.f32 %v1570, %v1707
          %v1723 = vmul.f32 %v1571, %v1707
          %v1724 = vld [vmem:[%s3] sm:$0x3]
          %v1726 = vperm.slane %v1724, 0
          %v1727 = vperm.slane %v1724, 1
          %v1730 = vmul.f32 %v1708, %v1726
          %v1731 = vmul.f32 %v1709, %v1727
          %v1732 = vmul.f32 %v1710, %v1726
          %v1733 = vmul.f32 %v1711, %v1727
          %v1734 = vmul.f32 %v1712, %v1726
          %v1735 = vmul.f32 %v1713, %v1727
          %v1736 = vmul.f32 %v1714, %v1726
          %v1737 = vmul.f32 %v1715, %v1727
          %v1738 = vmul.f32 %v1716, %v1726
          %v1739 = vmul.f32 %v1717, %v1727
          %v1740 = vmul.f32 %v1718, %v1726
          %v1741 = vmul.f32 %v1719, %v1727
          %v1742 = vmul.f32 %v1720, %v1726
          %v1743 = vmul.f32 %v1721, %v1727
          %v1744 = vmul.f32 %v1722, %v1726
          %v1745 = vmul.f32 %v1723, %v1727
          %v1746 = vld [vmem:[#allocation9] sm:$0x3]
          %v1748 = vperm.slane %v1746, 0
          %v1749 = vperm.slane %v1746, 1
          %v1752 = vadd.f32 %v1730, %v1748
          %v1753 = vadd.f32 %v1731, %v1749
          %v1754 = vadd.f32 %v1732, %v1748
          %v1755 = vadd.f32 %v1733, %v1749
          %v1756 = vadd.f32 %v1734, %v1748
          %v1757 = vadd.f32 %v1735, %v1749
          %v1758 = vadd.f32 %v1736, %v1748
          %v1759 = vadd.f32 %v1737, %v1749
          %v1760 = vadd.f32 %v1738, %v1748
          %v1761 = vadd.f32 %v1739, %v1749
          %v1762 = vadd.f32 %v1740, %v1748
          %v1763 = vadd.f32 %v1741, %v1749
          %v1764 = vadd.f32 %v1742, %v1748
          %v1765 = vadd.f32 %v1743, %v1749
          %v1766 = vadd.f32 %v1744, %v1748
          %v1767 = vadd.f32 %v1745, %v1749
          %v1768 = vpack.c.bf16 %v1753, %v1752
          %v1769 = vpack.c.bf16 %v1755, %v1754
          %v1770 = vpack.c.bf16 %v1757, %v1756
          %v1771 = vpack.c.bf16 %v1759, %v1758
          %v1772 = vpack.c.bf16 %v1761, %v1760
          %v1773 = vpack.c.bf16 %v1763, %v1762
          %v1774 = vpack.c.bf16 %v1765, %v1764
          %v1775 = vpack.c.bf16 %v1767, %v1766
          %1776 = vst [vmem:[#allocation2] sm:$0xff] %v1768
          %1777 = vst [vmem:[#allocation2 + $0x8] sm:$0xff] %v1769
          %1778 = vst [vmem:[#allocation2 + $0x10] sm:$0xff] %v1770
          %1779 = vst [vmem:[#allocation2 + $0x18] sm:$0xff] %v1771
          %1780 = vst [vmem:[#allocation2 + $0x20] sm:$0xff] %v1772
          %1781 = vst [vmem:[#allocation2 + $0x28] sm:$0xff] %v1773
          %1782 = vst [vmem:[#allocation2 + $0x30] sm:$0xff] %v1774
          %1783 = vst [vmem:[#allocation2 + $0x38] sm:$0xff] %v1775
        $region76: #{tpu_custom_call.1} parent=47 // pred_fallthru
          _
        %v1784 = vld [vmem:[#allocation2] sm:$0xff]
        %v1785 = vld [vmem:[#allocation2 + $0x8] sm:$0xff]
        %v1786 = vld [vmem:[#allocation2 + $0x10] sm:$0xff]
        %v1787 = vld [vmem:[#allocation2 + $0x18] sm:$0xff]
        %v1788 = vld [vmem:[#allocation2 + $0x20] sm:$0xff]
        %v1789 = vld [vmem:[#allocation2 + $0x28] sm:$0xff]
        %v1790 = vld [vmem:[#allocation2 + $0x30] sm:$0xff]
        %v1791 = vld [vmem:[#allocation2 + $0x38] sm:$0xff]
        %v1792 = vld [vmem:[%s383] sm:$0xff]
        %v1793 = vld [vmem:[%s383 + $0x8] sm:$0xff]
        %v1794 = vld [vmem:[%s383 + $0x10] sm:$0xff]
        %v1795 = vld [vmem:[%s383 + $0x18] sm:$0xff]
        %v1796 = vld [vmem:[%s383 + $0x20] sm:$0xff]
        %v1797 = vld [vmem:[%s383 + $0x28] sm:$0xff]
        %v1798 = vld [vmem:[%s383 + $0x30] sm:$0xff]
        %v1799 = vld [vmem:[%s383 + $0x38] sm:$0xff]
        %v1800 = vld [vmem:[%s383 + $0x40] sm:$0xff]
        %v1801 = vld [vmem:[%s383 + $0x48] sm:$0xff]
        %v1802 = vld [vmem:[%s383 + $0x50] sm:$0xff]
        %v1803 = vld [vmem:[%s383 + $0x58] sm:$0xff]
        %v1804 = vld [vmem:[%s383 + $0x60] sm:$0xff]
        %v1805 = vld [vmem:[%s383 + $0x68] sm:$0xff]
        %v1806 = vld [vmem:[%s383 + $0x70] sm:$0xff]
        %v1807 = vld [vmem:[%s383 + $0x78] sm:$0xff]
        %v1808 = vld [vmem:[%s383 + $0x80] sm:$0xff]
        %v1809 = vld [vmem:[%s383 + $0x88] sm:$0xff]
        %v1810 = vld [vmem:[%s383 + $0x90] sm:$0xff]
        %v1811 = vld [vmem:[%s383 + $0x98] sm:$0xff]
        %v1812 = vld [vmem:[%s383 + $0xa0] sm:$0xff]
        %v1813 = vld [vmem:[%s383 + $0xa8] sm:$0xff]
        %v1814 = vld [vmem:[%s383 + $0xb0] sm:$0xff]
        %v1815 = vld [vmem:[%s383 + $0xb8] sm:$0xff]
        %v1816 = vld [vmem:[%s383 + $0xc0] sm:$0xff]
        %v1817 = vld [vmem:[%s383 + $0xc8] sm:$0xff]
        %v1818 = vld [vmem:[%s383 + $0xd0] sm:$0xff]
        %v1819 = vld [vmem:[%s383 + $0xd8] sm:$0xff]
        %v1820 = vld [vmem:[%s383 + $0xe0] sm:$0xff]
        %v1821 = vld [vmem:[%s383 + $0xe8] sm:$0xff]
        %v1822 = vld [vmem:[%s383 + $0xf0] sm:$0xff]
        %v1823 = vld [vmem:[%s383 + $0xf8] sm:$0xff]
        %v1824 = vld [vmem:[%s393] sm:$0x3]
        %v1826 = vperm.slane %v1824, 0
        %v1827 = vperm.slane %v1824, 1
        %v1838 = vunpack.c.l.b16 %v1784
        %v1839 = vunpack.c.h.b16 %v1784
        %v1840 = vunpack.c.l.b16 %v1785
        %v1841 = vunpack.c.h.b16 %v1785
        %v1842 = vunpack.c.l.b16 %v1786
        %v1843 = vunpack.c.h.b16 %v1786
        %v1844 = vunpack.c.l.b16 %v1787
        %v1845 = vunpack.c.h.b16 %v1787
        %v1846 = vunpack.c.l.b16 %v1788
        %v1847 = vunpack.c.h.b16 %v1788
        %v1848 = vunpack.c.l.b16 %v1789
        %v1849 = vunpack.c.h.b16 %v1789
        %v1850 = vunpack.c.l.b16 %v1790
        %v1851 = vunpack.c.h.b16 %v1790
        %v1852 = vunpack.c.l.b16 %v1791
        %v1853 = vunpack.c.h.b16 %v1791
        %v1854 = vpack.c.b16 %v1840, %v1838
        %v1855 = vpack.c.b16 %v1841, %v1839
        %v1856 = vpack.c.b16 %v1844, %v1842
        %v1857 = vpack.c.b16 %v1845, %v1843
        %v1858 = vpack.c.b16 %v1848, %v1846
        %v1859 = vpack.c.b16 %v1849, %v1847
        %v1860 = vpack.c.b16 %v1852, %v1850
        %v1861 = vpack.c.b16 %v1853, %v1851
        %v1902 = vunpack.c.l.b16 %v1792
        %v1903 = vunpack.c.h.b16 %v1792
        %v1904 = vunpack.c.l.b16 %v1793
        %v1905 = vunpack.c.h.b16 %v1793
        %v1906 = vunpack.c.l.b16 %v1794
        %v1907 = vunpack.c.h.b16 %v1794
        %v1908 = vunpack.c.l.b16 %v1795
        %v1909 = vunpack.c.h.b16 %v1795
        %v1910 = vunpack.c.l.b16 %v1796
        %v1911 = vunpack.c.h.b16 %v1796
        %v1912 = vunpack.c.l.b16 %v1797
        %v1913 = vunpack.c.h.b16 %v1797
        %v1914 = vunpack.c.l.b16 %v1798
        %v1915 = vunpack.c.h.b16 %v1798
        %v1916 = vunpack.c.l.b16 %v1799
        %v1917 = vunpack.c.h.b16 %v1799
        %v1918 = vunpack.c.l.b16 %v1800
        %v1919 = vunpack.c.h.b16 %v1800
        %v1920 = vunpack.c.l.b16 %v1801
        %v1921 = vunpack.c.h.b16 %v1801
        %v1922 = vunpack.c.l.b16 %v1802
        %v1923 = vunpack.c.h.b16 %v1802
        %v1924 = vunpack.c.l.b16 %v1803
        %v1925 = vunpack.c.h.b16 %v1803
        %v1926 = vunpack.c.l.b16 %v1804
        %v1927 = vunpack.c.h.b16 %v1804
        %v1928 = vunpack.c.l.b16 %v1805
        %v1929 = vunpack.c.h.b16 %v1805
        %v1930 = vunpack.c.l.b16 %v1806
        %v1931 = vunpack.c.h.b16 %v1806
        %v1932 = vunpack.c.l.b16 %v1807
        %v1933 = vunpack.c.h.b16 %v1807
        %v1934 = vunpack.c.l.b16 %v1808
        %v1935 = vunpack.c.h.b16 %v1808
        %v1936 = vunpack.c.l.b16 %v1809
        %v1937 = vunpack.c.h.b16 %v1809
        %v1938 = vunpack.c.l.b16 %v1810
        %v1939 = vunpack.c.h.b16 %v1810
        %v1940 = vunpack.c.l.b16 %v1811
        %v1941 = vunpack.c.h.b16 %v1811
        %v1942 = vunpack.c.l.b16 %v1812
        %v1943 = vunpack.c.h.b16 %v1812
        %v1944 = vunpack.c.l.b16 %v1813
        %v1945 = vunpack.c.h.b16 %v1813
        %v1946 = vunpack.c.l.b16 %v1814
        %v1947 = vunpack.c.h.b16 %v1814
        %v1948 = vunpack.c.l.b16 %v1815
        %v1949 = vunpack.c.h.b16 %v1815
        %v1950 = vunpack.c.l.b16 %v1816
        %v1951 = vunpack.c.h.b16 %v1816
        %v1952 = vunpack.c.l.b16 %v1817
        %v1953 = vunpack.c.h.b16 %v1817
        %v1954 = vunpack.c.l.b16 %v1818
        %v1955 = vunpack.c.h.b16 %v1818
        %v1956 = vunpack.c.l.b16 %v1819
        %v1957 = vunpack.c.h.b16 %v1819
        %v1958 = vunpack.c.l.b16 %v1820
        %v1959 = vunpack.c.h.b16 %v1820
        %v1960 = vunpack.c.l.b16 %v1821
        %v1961 = vunpack.c.h.b16 %v1821
        %v1962 = vunpack.c.l.b16 %v1822
        %v1963 = vunpack.c.h.b16 %v1822
        %v1964 = vunpack.c.l.b16 %v1823
        %v1965 = vunpack.c.h.b16 %v1823
        %v1966 = vpack.c.b16 %v1904, %v1902
        %v1967 = vpack.c.b16 %v1905, %v1903
        %v1968 = vpack.c.b16 %v1908, %v1906
        %v1969 = vpack.c.b16 %v1909, %v1907
        %v1970 = vpack.c.b16 %v1912, %v1910
        %v1971 = vpack.c.b16 %v1913, %v1911
        %v1972 = vpack.c.b16 %v1916, %v1914
        %v1973 = vpack.c.b16 %v1917, %v1915
        %v1974 = vpack.c.b16 %v1920, %v1918
        %v1975 = vpack.c.b16 %v1921, %v1919
        %v1976 = vpack.c.b16 %v1924, %v1922
        %v1977 = vpack.c.b16 %v1925, %v1923
        %v1978 = vpack.c.b16 %v1928, %v1926
        %v1979 = vpack.c.b16 %v1929, %v1927
        %v1980 = vpack.c.b16 %v1932, %v1930
        %v1981 = vpack.c.b16 %v1933, %v1931
        %v1982 = vpack.c.b16 %v1936, %v1934
        %v1983 = vpack.c.b16 %v1937, %v1935
        %v1984 = vpack.c.b16 %v1940, %v1938
        %v1985 = vpack.c.b16 %v1941, %v1939
        %v1986 = vpack.c.b16 %v1944, %v1942
        %v1987 = vpack.c.b16 %v1945, %v1943
        %v1988 = vpack.c.b16 %v1948, %v1946
        %v1989 = vpack.c.b16 %v1949, %v1947
        %v1990 = vpack.c.b16 %v1952, %v1950
        %v1991 = vpack.c.b16 %v1953, %v1951
        %v1992 = vpack.c.b16 %v1956, %v1954
        %v1993 = vpack.c.b16 %v1957, %v1955
        %v1994 = vpack.c.b16 %v1960, %v1958
        %v1995 = vpack.c.b16 %v1961, %v1959
        %v1996 = vpack.c.b16 %v1964, %v1962
        %v1997 = vpack.c.b16 %v1965, %v1963
        %2030 = vmatpush.bf16.msra.mxu0 %v1980
        %2031 = vmatpush.bf16.msra.mxu0 %v1978
        %2032 = vmatpush.bf16.msra.mxu0 %v1976
        %2033 = vmatpush.bf16.msra.mxu0 %v1974
        %2034 = vmatpush.bf16.msra.mxu0 %v1972
        %2035 = vmatpush.bf16.msra.mxu0 %v1970
        %2036 = vmatpush.bf16.msra.mxu0 %v1968
        %2037 = vmatpush.bf16.msra.mxu0 %v1966
        %2038 = vmatmul.bf16.gmra.mxu0 %v1854
        %v2039 = vpop.f32.mrf.mxu0
        %v2040 = vadd.f32 %v1826, %v2039
        %v2041 = vpop.f32.mrf.mxu0
        %v2042 = vadd.f32 %v1826, %v2041
        %2043 = vmatmul.bf16.gmra.mxu0 %v1856
        %v2044 = vpop.f32.mrf.mxu0
        %v2045 = vadd.f32 %v1826, %v2044
        %v2046 = vpop.f32.mrf.mxu0
        %v2047 = vadd.f32 %v1826, %v2046
        %2048 = vmatmul.bf16.gmra.mxu0 %v1858
        %v2049 = vpop.f32.mrf.mxu0
        %v2050 = vadd.f32 %v1826, %v2049
        %v2051 = vpop.f32.mrf.mxu0
        %v2052 = vadd.f32 %v1826, %v2051
        %2053 = vmatmul.bf16.gmra.mxu0 %v1860
        %v2054 = vpop.f32.mrf.mxu0
        %v2055 = vadd.f32 %v1826, %v2054
        %v2056 = vpop.f32.mrf.mxu0
        %v2057 = vadd.f32 %v1826, %v2056
        %2058 = vdwg.mxu0
        %2059 = vmatpush.bf16.msra.mxu0 %v1996
        %2060 = vmatpush.bf16.msra.mxu0 %v1994
        %2061 = vmatpush.bf16.msra.mxu0 %v1992
        %2062 = vmatpush.bf16.msra.mxu0 %v1990
        %2063 = vmatpush.bf16.msra.mxu0 %v1988
        %2064 = vmatpush.bf16.msra.mxu0 %v1986
        %2065 = vmatpush.bf16.msra.mxu0 %v1984
        %2066 = vmatpush.bf16.msra.mxu0 %v1982
        %2067 = vmatmul.bf16.gmra.mxu0 %v1855
        %v2068 = vpop.f32.mrf.mxu0
        %v2069 = vadd.f32 %v2040, %v2068
        %v2070 = vpop.f32.mrf.mxu0
        %v2071 = vadd.f32 %v2042, %v2070
        %2072 = vmatmul.bf16.gmra.mxu0 %v1857
        %v2073 = vpop.f32.mrf.mxu0
        %v2074 = vadd.f32 %v2045, %v2073
        %v2075 = vpop.f32.mrf.mxu0
        %v2076 = vadd.f32 %v2047, %v2075
        %2077 = vmatmul.bf16.gmra.mxu0 %v1859
        %v2078 = vpop.f32.mrf.mxu0
        %v2079 = vadd.f32 %v2050, %v2078
        %v2080 = vpop.f32.mrf.mxu0
        %v2081 = vadd.f32 %v2052, %v2080
        %2082 = vmatmul.bf16.gmra.mxu0 %v1861
        %v2083 = vpop.f32.mrf.mxu0
        %v2084 = vadd.f32 %v2055, %v2083
        %v2085 = vpop.f32.mrf.mxu0
        %v2086 = vadd.f32 %v2057, %v2085
        %2087 = vdwg.mxu0
        %2088 = vmatpush.bf16.msra.mxu0 %v1981
        %2089 = vmatpush.bf16.msra.mxu0 %v1979
        %2090 = vmatpush.bf16.msra.mxu0 %v1977
        %2091 = vmatpush.bf16.msra.mxu0 %v1975
        %2092 = vmatpush.bf16.msra.mxu0 %v1973
        %2093 = vmatpush.bf16.msra.mxu0 %v1971
        %2094 = vmatpush.bf16.msra.mxu0 %v1969
        %2095 = vmatpush.bf16.msra.mxu0 %v1967
        %2096 = vmatmul.bf16.gmra.mxu0 %v1854
        %v2097 = vpop.f32.mrf.mxu0
        %v2098 = vadd.f32 %v1827, %v2097
        %v2099 = vpop.f32.mrf.mxu0
        %v2100 = vadd.f32 %v1827, %v2099
        %2101 = vmatmul.bf16.gmra.mxu0 %v1856
        %v2102 = vpop.f32.mrf.mxu0
        %v2103 = vadd.f32 %v1827, %v2102
        %v2104 = vpop.f32.mrf.mxu0
        %v2105 = vadd.f32 %v1827, %v2104
        %2106 = vmatmul.bf16.gmra.mxu0 %v1858
        %v2107 = vpop.f32.mrf.mxu0
        %v2108 = vadd.f32 %v1827, %v2107
        %v2109 = vpop.f32.mrf.mxu0
        %v2110 = vadd.f32 %v1827, %v2109
        %2111 = vmatmul.bf16.gmra.mxu0 %v1860
        %v2112 = vpop.f32.mrf.mxu0
        %v2113 = vadd.f32 %v1827, %v2112
        %v2114 = vpop.f32.mrf.mxu0
        %v2115 = vadd.f32 %v1827, %v2114
        %2116 = vdwg.mxu0
        %2117 = vmatpush.bf16.msra.mxu0 %v1997
        %2118 = vmatpush.bf16.msra.mxu0 %v1995
        %2119 = vmatpush.bf16.msra.mxu0 %v1993
        %2120 = vmatpush.bf16.msra.mxu0 %v1991
        %2121 = vmatpush.bf16.msra.mxu0 %v1989
        %2122 = vmatpush.bf16.msra.mxu0 %v1987
        %2123 = vmatpush.bf16.msra.mxu0 %v1985
        %2124 = vmatpush.bf16.msra.mxu0 %v1983
        %2125 = vmatmul.bf16.gmra.mxu0 %v1855
        %v2126 = vpop.f32.mrf.mxu0
        %v2127 = vadd.f32 %v2098, %v2126
        %v2128 = vpop.f32.mrf.mxu0
        %v2129 = vadd.f32 %v2100, %v2128
        %2130 = vmatmul.bf16.gmra.mxu0 %v1857
        %v2131 = vpop.f32.mrf.mxu0
        %v2132 = vadd.f32 %v2103, %v2131
        %v2133 = vpop.f32.mrf.mxu0
        %v2134 = vadd.f32 %v2105, %v2133
        %2135 = vmatmul.bf16.gmra.mxu0 %v1859
        %v2136 = vpop.f32.mrf.mxu0
        %v2137 = vadd.f32 %v2108, %v2136
        %v2138 = vpop.f32.mrf.mxu0
        %v2139 = vadd.f32 %v2110, %v2138
        %2140 = vmatmul.bf16.gmra.mxu0 %v1861
        %v2141 = vpop.f32.mrf.mxu0
        %v2142 = vadd.f32 %v2113, %v2141
        %v2143 = vpop.f32.mrf.mxu0
        %v2144 = vadd.f32 %v2115, %v2143
        %2145 = vdwg.mxu0
        %2146 = vst [vmem:[%s434] sm:$0xff] %v2069
        %2147 = vst [vmem:[%s434 + $0x8] sm:$0xff] %v2127
        %2148 = vst [vmem:[%s434 + $0x10] sm:$0xff] %v2071
        %2149 = vst [vmem:[%s434 + $0x18] sm:$0xff] %v2129
        %2150 = vst [vmem:[%s434 + $0x20] sm:$0xff] %v2074
        %2151 = vst [vmem:[%s434 + $0x28] sm:$0xff] %v2132
        %2152 = vst [vmem:[%s434 + $0x30] sm:$0xff] %v2076
        %2153 = vst [vmem:[%s434 + $0x38] sm:$0xff] %v2134
        %2154 = vst [vmem:[%s434 + $0x40] sm:$0xff] %v2079
        %2155 = vst [vmem:[%s434 + $0x48] sm:$0xff] %v2137
        %2156 = vst [vmem:[%s434 + $0x50] sm:$0xff] %v2081
        %2157 = vst [vmem:[%s434 + $0x58] sm:$0xff] %v2139
        %2158 = vst [vmem:[%s434 + $0x60] sm:$0xff] %v2084
        %2159 = vst [vmem:[%s434 + $0x68] sm:$0xff] %v2142
        %2160 = vst [vmem:[%s434 + $0x70] sm:$0xff] %v2086
        %2161 = vst [vmem:[%s434 + $0x78] sm:$0xff] %v2144
        %s2162 = sand.u32 %s210, 1
        %s2163 = scalar_lea.sflag [#allocation5], %s2162
        %s2164 = sand.u32 %s210, 1
        %s2165 = smul.addr %s2164, 128
        %s2166 = scalar_lea.vmem [#allocation13], %s2165
        // Predicated region
        $region77: #{tpu_custom_call.1} parent=47 // pred_check
          %p2167 = pneg %p220
        $region78: #{tpu_custom_call.1} parent=47 // pred_check_branch
          %2169 = sbr.rel (%p2167) target = $region80
        $region79: #{tpu_custom_call.1} parent=47 // pred_region
          %s2170 = smul.u32 8, %s30
          %s2171 = smul.u32 2, %s31
          %2173 = vsyncadd %s2163, 0
          %s2174 = smul.addr %s2170, 8
          %s2175 = sadd.s32 %s2171, %s2174
          %s2176 = smul.addr %s2175, 8
          %s2177 = scalar_lea.hbm %s7, %s2176
          %s2178 = sshll.u32 %s2166, 4
          %s2179 = int_to_ptr.vmem [resolvable:$true] %s2178
          %s2180 = sshll.u32 %s2177, 4
          %s2181 = int_to_ptr.hbm [resolvable:$true] %s2180
          %2186 = dma.vmem_to_hbm [thread:$0]  %s2179, 2048, %s2181, %s2163, 256, 1024, 16
        $region80: #{tpu_custom_call.1} parent=47 // pred_fallthru
          _
      $region48: #{tpu_custom_call.1} parent=5 // pred_fallthru
        _
      %p2187 = scmp.le.s32.totalorder 2, %s21
      // Predicated region
      $region81: #{tpu_custom_call.1} parent=5 // pred_check
        %p2188 = pneg %p2187
      $region82: #{tpu_custom_call.1} parent=5 // pred_check_branch
        %2190 = sbr.rel (%p2188) target = $region84
      $region83: #{tpu_custom_call.1} parent=5 // pred_region
        %s2191 = ssub.s32 %s21, 2
        // Predicated region
        $region85: #{tpu_custom_call.1} parent=83 // pred_check
          %p2192 = pneg %p226
        $region86: #{tpu_custom_call.1} parent=83 // pred_check_branch
          %2194 = sbr.rel (%p2192) target = $region88
        $region87: #{tpu_custom_call.1} parent=83 // pred_region
          %s2195 = sand.u32 %s211, 1
          %s2196 = scalar_lea.sflag [#allocation5], %s2195
          %s2197 = sand.u32 %s211, 1
          %s2198 = smul.addr %s2197, 128
          %s2199 = scalar_lea.vmem [#allocation13], %s2198
          %2201 = dma.done %s2196, 2048
        $region88: #{tpu_custom_call.1} parent=83 // pred_fallthru
          _
      $region84: #{tpu_custom_call.1} parent=5 // pred_fallthru
        _
    $region6: #{tpu_custom_call.1} parent=1 // loop_footer
      %s25 = sadd.s32 1, %s21
    $region7: #{tpu_custom_call.1} parent=1 // loop_footer_branch
      %20 = sbr.rel target = $region3
    $region8: #{tpu_custom_call.1} parent=1 // loop_exit
      _
    %2202 = vsyncpa [#allocation4], 1
    %s2203 = scalar_lea.sflag [#allocation4], 1
    %2204 = vsyncpa %s2203, 1
    %2205 = vsyncpa [#allocation7], 1
    %2206 = vsyncpa [#allocation10], 1
    %2207 = vsyncpa [#allocation5], 1
    %s2208 = scalar_lea.sflag [#allocation5], 1
    %2209 = vsyncpa %s2208, 1

</llo_original>
